<compile_context>
chip_gen: v5e
topology: v5e:2x2
jax: 0.10.0
libtpu: 0.0.40
codegen_flags: <defaults>
</compile_context>

<pallas_src>
import functools

import jax
import jax.numpy as jnp
from jax.experimental import pallas as pl
from jax.experimental.pallas import tpu as pltpu

# --- model hyper-parameters implied by the module __init__ -------------------
NUM_FTRS = 1920      # densenet201 classifier.in_features
HIDDEN   = 128       # replaced classifier output
NUM_CLS  = 2         # self.cls second Linear
SUBS     = 4         # Sub_Adaptor classes (constructor arg; small example value)
HEAD_PAD = 128       # lane-dense padded width of the fused cls/sub output
LEAKY_SLOPE = 0.01   # nn.LeakyReLU default


def _head_kernel(x_ref,                  # (n_tile*hw, c_tile) bf16 features (relu'd below)
                 w1_ref, b1_ref,         # classifier Linear(1920, 128): bf16 W, f32 b
                 wc_ref, ws_ref, bh_ref, # padded cls/sub head weights (bf16) + fused bias (f32)
                 out_ref,                # (n_tile, HEAD_PAD) f32 fused head output
                 feat_acc,               # VMEM f32 accumulator (n_tile, HIDDEN)
                 *, n_tile, hw):
    k = pl.program_id(1)                 # channel-tile (reduction) axis, innermost

    @pl.when(k == 0)
    def _():
        feat_acc[...] = jnp.zeros_like(feat_acc)

    # DenseNet tail, matmul-first: bf16 relu (packed VPU) feeds the MXU directly;
    # the HW pooling happens on the small f32 result, not on the c_tile-wide slab.
    x = jnp.maximum(x_ref[...], 0)                                        # bf16 relu
    part = jnp.dot(x, w1_ref[...], preferred_element_type=jnp.float32)    # (n_tile*hw, 128)
    feat_acc[...] += part.reshape(n_tile, hw, HIDDEN).sum(axis=1)

    @pl.when(k == pl.num_programs(1) - 1)
    def _():
        # Dropout(0.5) is identity in eval mode; divide the accumulated HW-sum here.
        feat = feat_acc[...] * (1.0 / hw) + b1_ref[...]                   # (n_tile, 128)
        # cls head: LeakyReLU(0.01); sub head: GradReverse is identity in forward.
        lrelu = jnp.where(feat > 0, feat, LEAKY_SLOPE * feat)
        # Fused heads: two bf16 MXU dots into one lane-dense padded output
        # (cls in cols [0, NUM_CLS), sub in cols [NUM_CLS, NUM_CLS+subs)).
        out_ref[...] = (
            jnp.dot(lrelu.astype(jnp.bfloat16), wc_ref[...],
                    preferred_element_type=jnp.float32)
            + jnp.dot(feat.astype(jnp.bfloat16), ws_ref[...],
                      preferred_element_type=jnp.float32)
            + bh_ref[...])


def _pick_tiles(n, hw, c, feat_buf_budget=8 << 20):
    """Largest (n_tile, c_tile): bf16 feature tile fits the per-buffer VMEM budget."""
    c_cands = [x for x in (1920, 960, 640, 384, 256, 128) if x <= c and c % x == 0] or [c]
    n_cands = [x for x in (256, 128, 64, 32, 16, 8, 4, 2, 1) if x <= n and n % x == 0] or [n]
    for ct in c_cands:                       # prefer wide C tiles: long contiguous DMA rows
        for nt in n_cands:
            aligned = (nt % 8 == 0) or (nt == n)          # (8,128) block rule
            if aligned and nt * hw * ct * 2 <= feat_buf_budget:
                return nt, ct
    nt = next((x for x in reversed(n_cands) if x % 8 == 0 or x == n), n)
    return nt, c_cands[-1]


@jax.jit
def single_branch_cnn_forward(features_nchw, branch_idx, params):
    """features_nchw: (branches, N, C, H, W) float32; branch_idx: (1,) int32."""
    w1, b1, wc, bc, ws, bs = params
    nb, n, c, h, w = features_nchw.shape
    hw = h * w
    subs = ws.shape[1]

    # Branch select FIRST (only one branch's map is ever transposed / cast), then
    # NCHW -> (N*HW, C) bf16: channels on lanes, HW folded into rows (no sublane
    # padding for production 7x7 maps), bf16 halves the dominant HBM read.
    sel = jax.lax.dynamic_index_in_dim(features_nchw, branch_idx[0], 0, keepdims=False)
    feats = jnp.transpose(sel, (0, 2, 3, 1)).reshape(n * hw, c).astype(jnp.bfloat16)
    w1_bf = w1.astype(jnp.bfloat16)

    # Fused, lane-padded cls/sub head weights + bias (epilogue writes one dense block).
    wcp = jnp.zeros((HIDDEN, HEAD_PAD), jnp.float32).at[:, :NUM_CLS].set(wc)
    wsp = jnp.zeros((HIDDEN, HEAD_PAD), jnp.float32).at[:, NUM_CLS:NUM_CLS + subs].set(ws)
    bh = (jnp.zeros((1, HEAD_PAD), jnp.float32)
          .at[:, :NUM_CLS].set(bc)
          .at[:, NUM_CLS:NUM_CLS + subs].set(bs))
    wcp_bf, wsp_bf = wcp.astype(jnp.bfloat16), wsp.astype(jnp.bfloat16)

    n_tile, c_tile = _pick_tiles(n, hw, c)
    rows_tile = n_tile * hw
    grid = (n // n_tile, c // c_tile)

    # Explicit VMEM budget: double-buffered feature + w1 tiles, accumulator, heads.
    vmem_need = (2 * rows_tile * c_tile * 2 + 2 * c_tile * HIDDEN * 2
                 + n_tile * HIDDEN * 4 + 4 * HIDDEN * HEAD_PAD * 2
                 + 2 * n_tile * HEAD_PAD * 4 + (1 << 20))
    vmem_limit = int(min(max(vmem_need, 32 << 20), 56 << 20))   # ok on v5e/v6e/v7x

    grid_spec = pltpu.PrefetchScalarGridSpec(
        num_scalar_prefetch=0,
        grid=grid,
        in_specs=[
            pl.BlockSpec((rows_tile, c_tile), lambda i, k: (i, k)),
            pl.BlockSpec((c_tile, HIDDEN),    lambda i, k: (k, 0)),
            pl.BlockSpec((1, HIDDEN),         lambda i, k: (0, 0)),
            pl.BlockSpec((HIDDEN, HEAD_PAD),  lambda i, k: (0, 0)),
            pl.BlockSpec((HIDDEN, HEAD_PAD),  lambda i, k: (0, 0)),
            pl.BlockSpec((1, HEAD_PAD),       lambda i, k: (0, 0)),
        ],
        out_specs=pl.BlockSpec((n_tile, HEAD_PAD), lambda i, k: (i, 0)),
        scratch_shapes=[pltpu.VMEM((n_tile, HIDDEN), jnp.float32)],
    )

    cost = pl.CostEstimate(
        flops=2 * n * hw * c * HIDDEN + 2 * n * (2 * HIDDEN) * HEAD_PAD,
        transcendentals=0,
        bytes_accessed=(n * hw * c * 2 + c * HIDDEN * 2
                        + 2 * HIDDEN * HEAD_PAD * 2 + (HIDDEN + HEAD_PAD) * 4
                        + n * HEAD_PAD * 4),
    )

    head_out = pl.pallas_call(
        functools.partial(_head_kernel, n_tile=n_tile, hw=hw),
        grid_spec=grid_spec,
        out_shape=jax.ShapeDtypeStruct((n, HEAD_PAD), jnp.float32),
        compiler_params=pltpu.CompilerParams(
            dimension_semantics=("parallel", "arbitrary"),
            vmem_limit_bytes=vmem_limit),
        cost_estimate=cost,
    )(feats, w1_bf, b1, wcp_bf, wsp_bf, bh)

    return head_out[:, :NUM_CLS], head_out[:, NUM_CLS:NUM_CLS + subs]


def _init_linear(key, fan_in, fan_out):
    """PyTorch nn.Linear default init: U(-1/sqrt(fan_in), 1/sqrt(fan_in))."""
    kw, kb = jax.random.split(key)
    bound = 1.0 / jnp.sqrt(jnp.float32(fan_in))
    w = jax.random.uniform(kw, (fan_in, fan_out), jnp.float32, -bound, bound)
    b = jax.random.uniform(kb, (1, fan_out), jnp.float32, -bound, bound)
    return w, b


def _reference(features_nchw, branch_idx, params):
    """Pure-JAX reference mirroring the kernel's bf16 rounding points."""
    w1, b1, wc, bc, ws, bs = params
    nb, n, c, h, w = features_nchw.shape
    x = features_nchw[branch_idx[0]]                                   # (N, C, H, W)
    x = jnp.transpose(x, (0, 2, 3, 1)).reshape(n, h * w, c).astype(jnp.bfloat16)
    x = jnp.maximum(x, 0).astype(jnp.float32)                          # relu (bf16 input)
    pooled = jnp.mean(x, axis=1)                                       # (N, C)
    w1_f = w1.astype(jnp.bfloat16).astype(jnp.float32)
    feat = pooled @ w1_f + b1
    lrelu = jnp.where(feat > 0, feat, LEAKY_SLOPE * feat)
    lrelu_bf = lrelu.astype(jnp.bfloat16).astype(jnp.float32)
    feat_bf = feat.astype(jnp.bfloat16).astype(jnp.float32)
    wc_f = wc.astype(jnp.bfloat16).astype(jnp.float32)
    ws_f = ws.astype(jnp.bfloat16).astype(jnp.float32)
    return lrelu_bf @ wc_f + bc, feat_bf @ ws_f + bs


if __name__ == "__main__":
    key = jax.random.PRNGKey(0)
    k_feat, k_br, k_l1, k_lc, k_ls = jax.random.split(key, 5)

    # Small example shapes: 3 input "views" (inp[rand_ch], rand_ch in {1,2}),
    # batch N=2, DenseNet-201 feature maps C=1920 at a small 4x4 spatial size.
    BRANCHES, N, H, W = 3, 2, 4, 4
    features = jax.random.normal(k_feat, (BRANCHES, N, NUM_FTRS, H, W), jnp.float32)

    # torch.randint(1, 3, size=(1,)) equivalent (deterministic via PRNGKey).
    branch_idx = jax.random.randint(k_br, (1,), 1, 3, dtype=jnp.int32)

    # Deterministic parameter init (classifier Linear, cls Linear, sub Linear).
    w1, b1 = _init_linear(k_l1, NUM_FTRS, HIDDEN)
    wc, bc = _init_linear(k_lc, HIDDEN, NUM_CLS)
    ws, bs = _init_linear(k_ls, HIDDEN, SUBS)
    params = (w1, b1, wc, bc, ws, bs)

    cls_out, sub_out = single_branch_cnn_forward(features, branch_idx, params)
    jax.block_until_ready((cls_out, sub_out))

    ref_cls, ref_sub = _reference(features, branch_idx, params)
    assert cls_out.shape == (N, NUM_CLS) and sub_out.shape == (N, SUBS)
    assert jnp.allclose(cls_out, ref_cls, atol=1e-2, rtol=1e-2)
    assert jnp.allclose(sub_out, ref_sub, atol=1e-2, rtol=1e-2)

    print("KERNEL_OK")
</pallas_src>

<mosaic_0001>
module attributes {stable_mosaic.version = 11 : i64} {
  func.func @_head_kernel(%arg0: i32, %arg1: i32, %arg2: memref<32x1920xbf16, #tpu.memory_space<vmem>>, %arg3: memref<1920x128xbf16, #tpu.memory_space<vmem>>, %arg4: memref<1x128xf32, #tpu.memory_space<vmem>>, %arg5: memref<128x128xbf16, #tpu.memory_space<vmem>>, %arg6: memref<128x128xbf16, #tpu.memory_space<vmem>>, %arg7: memref<1x128xf32, #tpu.memory_space<vmem>>, %arg8: memref<2x128xf32, #tpu.memory_space<vmem>>, %arg9: memref<2x128xf32, #tpu.memory_space<vmem>>) attributes {dimension_semantics = [#tpu.dimension_semantics<parallel>, #tpu.dimension_semantics<arbitrary>], iteration_bounds = array<i64: 1, 1>, scalar_prefetch = 0 : i64, scratch_operands = 1 : i64, tpu.core_type = #tpu.core_type<tc>, window_params = [{transform_indices = @transform_0, window_bounds = array<i64: 32, 1920>}, {transform_indices = @transform_1, window_bounds = array<i64: 1920, 128>}, {pipeline_mode = #tpu.pipeline_mode<synchronous>, transform_indices = @transform_2, window_bounds = array<i64: 1, 128>}, {pipeline_mode = #tpu.pipeline_mode<synchronous>, transform_indices = @transform_3, window_bounds = array<i64: 128, 128>}, {pipeline_mode = #tpu.pipeline_mode<synchronous>, transform_indices = @transform_4, window_bounds = array<i64: 128, 128>}, {pipeline_mode = #tpu.pipeline_mode<synchronous>, transform_indices = @transform_5, window_bounds = array<i64: 1, 128>}, {transform_indices = @transform_6, window_bounds = array<i64: 2, 128>}]} {
    %c0_i32 = arith.constant 0 : i32
    %0 = arith.cmpi eq, %arg1, %c0_i32 : i32
    %1 = arith.extui %0 : i1 to i32
    %c0_i32_0 = arith.constant 0 : i32
    %2 = arith.cmpi ne, %1, %c0_i32_0 : i32
    scf.if %2 {
      %cst_12 = arith.constant 0.000000e+00 : f32
      %16 = vector.broadcast %cst_12 : f32 to vector<2x128xf32>
      %c0_13 = arith.constant 0 : index
      %c0_14 = arith.constant 0 : index
      %17 = vector.load %arg9[%c0_13, %c0_14] : memref<2x128xf32, #tpu.memory_space<vmem>>, vector<2x128xf32>
      tpu.vector_store %arg9[%c0_13, %c0_14], %16 {strides = array<i32>} : memref<2x128xf32, #tpu.memory_space<vmem>>, vector<2x128xf32>,
    } else {
    }
    %c0 = arith.constant 0 : index
    %c0_1 = arith.constant 0 : index
    %3 = vector.load %arg2[%c0, %c0_1] : memref<32x1920xbf16, #tpu.memory_space<vmem>>, vector<32x1920xbf16>
    %cst = arith.constant 0.000000e+00 : bf16
    %4 = vector.broadcast %cst : bf16 to vector<32x1920xbf16>
    %5 = arith.maximumf %3, %4 : vector<32x1920xbf16>
    %c0_2 = arith.constant 0 : index
    %c0_3 = arith.constant 0 : index
    %6 = vector.load %arg3[%c0_2, %c0_3] : memref<1920x128xbf16, #tpu.memory_space<vmem>>, vector<1920x128xbf16>
    %cst_4 = arith.constant dense<0.000000e+00> : vector<32x128xf32>
    %7 = tpu.matmul %5, %6, %cst_4 {dimension_numbers = #tpu.dot_dimension_numbers<[1], [0], [0], [1], [0, 0, 1, 1], [], []>} : vector<32x1920xbf16>, vector<1920x128xbf16>, vector<32x128xf32> -> vector<32x128xf32>
    %c0_5 = arith.constant 0 : index
    %c0_6 = arith.constant 0 : index
    %8 = vector.load %arg9[%c0_5, %c0_6] : memref<2x128xf32, #tpu.memory_space<vmem>>, vector<2x128xf32>
    %9 = vector.shape_cast %7 : vector<32x128xf32> to vector<2x16x128xf32>
    %cst_7 = arith.constant dense<0.000000e+00> : vector<2x128xf32>
    %10 = vector.multi_reduction <add>, %9, %cst_7 [1] : vector<2x16x128xf32> to vector<2x128xf32>
    %11 = arith.addf %8, %10 : vector<2x128xf32>
    %c0_8 = arith.constant 0 : index
    %c0_9 = arith.constant 0 : index
    %12 = vector.load %arg9[%c0_8, %c0_9] : memref<2x128xf32, #tpu.memory_space<vmem>>, vector<2x128xf32>
    tpu.vector_store %arg9[%c0_8, %c0_9], %11 {strides = array<i32>} : memref<2x128xf32, #tpu.memory_space<vmem>>, vector<2x128xf32>,
    %c0_i32_10 = arith.constant 0 : i32
    %13 = arith.cmpi eq, %arg1, %c0_i32_10 : i32
    %14 = arith.extui %13 : i1 to i32
    %c0_i32_11 = arith.constant 0 : i32
    %15 = arith.cmpi ne, %14, %c0_i32_11 : i32
    scf.if %15 {
      %c0_12 = arith.constant 0 : index
      %c0_13 = arith.constant 0 : index
      %16 = vector.load %arg9[%c0_12, %c0_13] : memref<2x128xf32, #tpu.memory_space<vmem>>, vector<2x128xf32>
      %cst_14 = arith.constant 6.250000e-02 : f32
      %17 = vector.broadcast %cst_14 : f32 to vector<2x128xf32>
      %18 = arith.mulf %16, %17 : vector<2x128xf32>
      %c0_15 = arith.constant 0 : index
      %c0_16 = arith.constant 0 : index
      %19 = vector.load %arg4[%c0_15, %c0_16] : memref<1x128xf32, #tpu.memory_space<vmem>>, vector<1x128xf32>
      %20 = vector.broadcast %19 : vector<1x128xf32> to vector<2x128xf32>
      %21 = arith.addf %18, %20 : vector<2x128xf32>
      %cst_17 = arith.constant 0.000000e+00 : f32
      %22 = vector.broadcast %cst_17 : f32 to vector<2x128xf32>
      %23 = arith.cmpf ogt, %21, %22 : vector<2x128xf32>
      %cst_18 = arith.constant 0.00999999977 : f32
      %24 = vector.broadcast %cst_18 : f32 to vector<2x128xf32>
      %25 = arith.mulf %24, %21 : vector<2x128xf32>
      %26 = arith.select %23, %21, %25 : vector<2x128xi1>, vector<2x128xf32>
      %27 = arith.truncf %26 : vector<2x128xf32> to vector<2x128xbf16>
      %c0_19 = arith.constant 0 : index
      %c0_20 = arith.constant 0 : index
      %28 = vector.load %arg5[%c0_19, %c0_20] : memref<128x128xbf16, #tpu.memory_space<vmem>>, vector<128x128xbf16>
      %cst_21 = arith.constant dense<0.000000e+00> : vector<2x128xf32>
      %29 = tpu.matmul %27, %28, %cst_21 {dimension_numbers = #tpu.dot_dimension_numbers<[1], [0], [0], [1], [0, 0, 1, 1], [], []>} : vector<2x128xbf16>, vector<128x128xbf16>, vector<2x128xf32> -> vector<2x128xf32>
      %30 = arith.truncf %21 : vector<2x128xf32> to vector<2x128xbf16>
      %c0_22 = arith.constant 0 : index
      %c0_23 = arith.constant 0 : index
      %31 = vector.load %arg6[%c0_22, %c0_23] : memref<128x128xbf16, #tpu.memory_space<vmem>>, vector<128x128xbf16>
      %cst_24 = arith.constant dense<0.000000e+00> : vector<2x128xf32>
      %32 = tpu.matmul %30, %31, %cst_24 {dimension_numbers = #tpu.dot_dimension_numbers<[1], [0], [0], [1], [0, 0, 1, 1], [], []>} : vector<2x128xbf16>, vector<128x128xbf16>, vector<2x128xf32> -> vector<2x128xf32>
      %33 = arith.addf %29, %32 : vector<2x128xf32>
      %c0_25 = arith.constant 0 : index
      %c0_26 = arith.constant 0 : index
      %34 = vector.load %arg7[%c0_25, %c0_26] : memref<1x128xf32, #tpu.memory_space<vmem>>, vector<1x128xf32>
      %35 = vector.broadcast %34 : vector<1x128xf32> to vector<2x128xf32>
      %36 = arith.addf %33, %35 : vector<2x128xf32>
      %c0_27 = arith.constant 0 : index
      %c0_28 = arith.constant 0 : index
      %37 = vector.load %arg8[%c0_27, %c0_28] : memref<2x128xf32, #tpu.memory_space<vmem>>, vector<2x128xf32>
      tpu.vector_store %arg8[%c0_27, %c0_28], %36 {strides = array<i32>} : memref<2x128xf32, #tpu.memory_space<vmem>>, vector<2x128xf32>,
    } else {
    }
    return
  }
  func.func @transform_0(%arg0: i32, %arg1: i32) -> (i32, i32) {
    %c0_i32 = arith.constant 0 : i32
    return %arg0, %arg1 : i32, i32
  }
  func.func @transform_1(%arg0: i32, %arg1: i32) -> (i32, i32) {
    %c0_i32 = arith.constant 0 : i32
    %c0_i32_0 = arith.constant 0 : i32
    return %arg1, %c0_i32 : i32, i32
  }
  func.func @transform_2(%arg0: i32, %arg1: i32) -> (i32, i32) {
    %c0_i32 = arith.constant 0 : i32
    %c0_i32_0 = arith.constant 0 : i32
    %c0_i32_1 = arith.constant 0 : i32
    return %c0_i32, %c0_i32_0 : i32, i32
  }
  func.func @transform_3(%arg0: i32, %arg1: i32) -> (i32, i32) {
    %c0_i32 = arith.constant 0 : i32
    %c0_i32_0 = arith.constant 0 : i32
    %c0_i32_1 = arith.constant 0 : i32
    return %c0_i32, %c0_i32_0 : i32, i32
  }
  func.func @transform_4(%arg0: i32, %arg1: i32) -> (i32, i32) {
    %c0_i32 = arith.constant 0 : i32
    %c0_i32_0 = arith.constant 0 : i32
    %c0_i32_1 = arith.constant 0 : i32
    return %c0_i32, %c0_i32_0 : i32, i32
  }
  func.func @transform_5(%arg0: i32, %arg1: i32) -> (i32, i32) {
    %c0_i32 = arith.constant 0 : i32
    %c0_i32_0 = arith.constant 0 : i32
    %c0_i32_1 = arith.constant 0 : i32
    return %c0_i32, %c0_i32_0 : i32, i32
  }
  func.func @transform_6(%arg0: i32, %arg1: i32) -> (i32, i32) {
    %c0_i32 = arith.constant 0 : i32
    %c0_i32_0 = arith.constant 0 : i32
    return %arg0, %c0_i32 : i32, i32
  }
}

</mosaic_0001>

<llo_original>
// kernel: single_branch_cnn_forward.1
$region0: #{single_branch_cnn_forward.1}
  #allocation0 [shape = 'u32[]', space=smem, size = 0x4, offset = 0x4, fixed_abs, tag = 'smem constant byte address 0x4 - core index']
  #allocation1 [shape = 'u32[72,128]{1,0:T(1,128)}', space=vmem, size = 0x9000, scoped, tag = 'internal scratch']
  #allocation2 [shape = 'f32[2,128]{1,0:T(2,128)}', space=vmem, size = 0x400, scoped, tag = 'scratch operand']
  %s0 = inlined_call_operand.vmem [shape: bf16[32,1920], index: 0, kind: input, shape index: {}]
  %s1 = inlined_call_operand.vmem [shape: bf16[1920,128], index: 1, kind: input, shape index: {}]
  %s2 = inlined_call_operand.vmem [shape: f32[1,128], index: 2, kind: input, shape index: {}]
  %s3 = inlined_call_operand.vmem [shape: bf16[128,128], index: 3, kind: input, shape index: {}]
  %s4 = inlined_call_operand.vmem [shape: bf16[128,128], index: 4, kind: input, shape index: {}]
  %s5 = inlined_call_operand.vmem [shape: f32[1,128], index: 5, kind: input, shape index: {}]
  %s6 = inlined_call_operand.vmem [shape: f32[2,128], index: 6, kind: output, shape index: {}]
  %s7 = sld [smem:[#allocation0]]
  $region42: #{single_branch_cnn_forward.1} parent=0
    _
  %s9 = ssub.s32 1, %s7
  %s10 = scalar_select 0, %s9, %s7
  // Predicated region
  $region2: #{single_branch_cnn_forward.1} parent=0 // pred_check
    _
  $region3: #{single_branch_cnn_forward.1} parent=0 // pred_check_branch
    %12 = sbr.rel (0) target = $region5
  $region4: #{single_branch_cnn_forward.1} parent=0 // pred_region
    _
  $region5: #{single_branch_cnn_forward.1} parent=0 // pred_fallthru
    _
  // Predicated region
  $region6: #{single_branch_cnn_forward.1} parent=0 // pred_check
    _
  $region7: #{single_branch_cnn_forward.1} parent=0 // pred_check_branch
    %14 = sbr.rel (0) target = $region9
  $region8: #{single_branch_cnn_forward.1} parent=0 // pred_region
    _
  $region9: #{single_branch_cnn_forward.1} parent=0 // pred_fallthru
    _
  // Predicated region
  $region10: #{single_branch_cnn_forward.1} parent=0 // pred_check
    _
  $region11: #{single_branch_cnn_forward.1} parent=0 // pred_check_branch
    %16 = sbr.rel (0) target = $region13
  $region12: #{single_branch_cnn_forward.1} parent=0 // pred_region
    _
  $region13: #{single_branch_cnn_forward.1} parent=0 // pred_fallthru
    _
  // Predicated region
  $region14: #{single_branch_cnn_forward.1} parent=0 // pred_check
    _
  $region15: #{single_branch_cnn_forward.1} parent=0 // pred_check_branch
    %18 = sbr.rel (0) target = $region17
  $region16: #{single_branch_cnn_forward.1} parent=0 // pred_region
    _
  $region17: #{single_branch_cnn_forward.1} parent=0 // pred_fallthru
    _
  // Predicated region
  $region18: #{single_branch_cnn_forward.1} parent=0 // pred_check
    _
  $region19: #{single_branch_cnn_forward.1} parent=0 // pred_check_branch
    %20 = sbr.rel (0) target = $region21
  $region20: #{single_branch_cnn_forward.1} parent=0 // pred_region
    _
  $region21: #{single_branch_cnn_forward.1} parent=0 // pred_fallthru
    _
  // Predicated region
  $region22: #{single_branch_cnn_forward.1} parent=0 // pred_check
    _
  $region23: #{single_branch_cnn_forward.1} parent=0 // pred_check_branch
    %22 = sbr.rel (0) target = $region25
  $region24: #{single_branch_cnn_forward.1} parent=0 // pred_region
    _
  $region25: #{single_branch_cnn_forward.1} parent=0 // pred_fallthru
    _
  %p23 = scmp.eq.s32.totalorder 0, 0
  // Predicated region
  $region26: #{single_branch_cnn_forward.1} parent=0 // pred_check
    %p24 = pneg %p23
  $region27: #{single_branch_cnn_forward.1} parent=0 // pred_check_branch
    %26 = sbr.rel (%p24) target = $region29
  $region28: #{single_branch_cnn_forward.1} parent=0 // pred_region
    %27 = vst [vmem:[#allocation2] sm:$0x3] 0.0
  $region29: #{single_branch_cnn_forward.1} parent=0 // pred_fallthru
    _
  %v28 = vld [vmem:[%s0] sm:$0xff]
  %v29 = vld [vmem:[%s0 + $0x8] sm:$0xff]
  %v30 = vld [vmem:[%s0 + $0x10] sm:$0xff]
  %v31 = vld [vmem:[%s0 + $0x18] sm:$0xff]
  %v32 = vld [vmem:[%s0 + $0x20] sm:$0xff]
  %v33 = vld [vmem:[%s0 + $0x28] sm:$0xff]
  %v34 = vld [vmem:[%s0 + $0x30] sm:$0xff]
  %v35 = vld [vmem:[%s0 + $0x38] sm:$0xf]
  %v36 = vld [vmem:[%s0 + $0x3c] sm:$0xff]
  %v37 = vld [vmem:[%s0 + $0x44] sm:$0xff]
  %v38 = vld [vmem:[%s0 + $0x4c] sm:$0xff]
  %v39 = vld [vmem:[%s0 + $0x54] sm:$0xff]
  %v40 = vld [vmem:[%s0 + $0x5c] sm:$0xff]
  %v41 = vld [vmem:[%s0 + $0x64] sm:$0xff]
  %v42 = vld [vmem:[%s0 + $0x6c] sm:$0xff]
  %v43 = vld [vmem:[%s0 + $0x74] sm:$0xf]
  %v44 = vld [vmem:[%s0 + $0x78] sm:$0xff]
  %v45 = vld [vmem:[%s0 + $0x80] sm:$0xff]
  %v46 = vld [vmem:[%s0 + $0x88] sm:$0xff]
  %v47 = vld [vmem:[%s0 + $0x90] sm:$0xff]
  %v48 = vld [vmem:[%s0 + $0x98] sm:$0xff]
  %v49 = vld [vmem:[%s0 + $0xa0] sm:$0xff]
  %v50 = vld [vmem:[%s0 + $0xa8] sm:$0xff]
  %v51 = vld [vmem:[%s0 + $0xb0] sm:$0xf]
  %v52 = vld [vmem:[%s0 + $0xb4] sm:$0xff]
  %v53 = vld [vmem:[%s0 + $0xbc] sm:$0xff]
  %v54 = vld [vmem:[%s0 + $0xc4] sm:$0xff]
  %v55 = vld [vmem:[%s0 + $0xcc] sm:$0xff]
  %v56 = vld [vmem:[%s0 + $0xd4] sm:$0xff]
  %v57 = vld [vmem:[%s0 + $0xdc] sm:$0xff]
  %v58 = vld [vmem:[%s0 + $0xe4] sm:$0xff]
  %v59 = vld [vmem:[%s0 + $0xec] sm:$0xf]
  %v60 = vunpack.c.l.bf16 %v28
  %v61 = vunpack.c.h.bf16 %v28
  %v62 = vunpack.c.l.bf16 %v29
  %v63 = vunpack.c.h.bf16 %v29
  %v64 = vunpack.c.l.bf16 %v30
  %v65 = vunpack.c.h.bf16 %v30
  %v66 = vunpack.c.l.bf16 %v31
  %v67 = vunpack.c.h.bf16 %v31
  %v68 = vunpack.c.l.bf16 %v32
  %v69 = vunpack.c.h.bf16 %v32
  %v70 = vunpack.c.l.bf16 %v33
  %v71 = vunpack.c.h.bf16 %v33
  %v72 = vunpack.c.l.bf16 %v34
  %v73 = vunpack.c.h.bf16 %v34
  %v74 = vunpack.c.l.bf16 %v35
  %v75 = vunpack.c.l.bf16 %v36
  %v76 = vunpack.c.h.bf16 %v36
  %v77 = vunpack.c.l.bf16 %v37
  %v78 = vunpack.c.h.bf16 %v37
  %v79 = vunpack.c.l.bf16 %v38
  %v80 = vunpack.c.h.bf16 %v38
  %v81 = vunpack.c.l.bf16 %v39
  %v82 = vunpack.c.h.bf16 %v39
  %v83 = vunpack.c.l.bf16 %v40
  %v84 = vunpack.c.h.bf16 %v40
  %v85 = vunpack.c.l.bf16 %v41
  %v86 = vunpack.c.h.bf16 %v41
  %v87 = vunpack.c.l.bf16 %v42
  %v88 = vunpack.c.h.bf16 %v42
  %v89 = vunpack.c.l.bf16 %v43
  %v90 = vunpack.c.l.bf16 %v44
  %v91 = vunpack.c.h.bf16 %v44
  %v92 = vunpack.c.l.bf16 %v45
  %v93 = vunpack.c.h.bf16 %v45
  %v94 = vunpack.c.l.bf16 %v46
  %v95 = vunpack.c.h.bf16 %v46
  %v96 = vunpack.c.l.bf16 %v47
  %v97 = vunpack.c.h.bf16 %v47
  %v98 = vunpack.c.l.bf16 %v48
  %v99 = vunpack.c.h.bf16 %v48
  %v100 = vunpack.c.l.bf16 %v49
  %v101 = vunpack.c.h.bf16 %v49
  %v102 = vunpack.c.l.bf16 %v50
  %v103 = vunpack.c.h.bf16 %v50
  %v104 = vunpack.c.l.bf16 %v51
  %v105 = vunpack.c.l.bf16 %v52
  %v106 = vunpack.c.h.bf16 %v52
  %v107 = vunpack.c.l.bf16 %v53
  %v108 = vunpack.c.h.bf16 %v53
  %v109 = vunpack.c.l.bf16 %v54
  %v110 = vunpack.c.h.bf16 %v54
  %v111 = vunpack.c.l.bf16 %v55
  %v112 = vunpack.c.h.bf16 %v55
  %v113 = vunpack.c.l.bf16 %v56
  %v114 = vunpack.c.h.bf16 %v56
  %v115 = vunpack.c.l.bf16 %v57
  %v116 = vunpack.c.h.bf16 %v57
  %v117 = vunpack.c.l.bf16 %v58
  %v118 = vunpack.c.h.bf16 %v58
  %v119 = vunpack.c.l.bf16 %v59
  %v120 = vmax.f32 %v60, 0.0
  %v121 = vmax.f32 %v61, 0.0
  %v122 = vmax.f32 %v62, 0.0
  %v123 = vmax.f32 %v63, 0.0
  %v124 = vmax.f32 %v64, 0.0
  %v125 = vmax.f32 %v65, 0.0
  %v126 = vmax.f32 %v66, 0.0
  %v127 = vmax.f32 %v67, 0.0
  %v128 = vmax.f32 %v68, 0.0
  %v129 = vmax.f32 %v69, 0.0
  %v130 = vmax.f32 %v70, 0.0
  %v131 = vmax.f32 %v71, 0.0
  %v132 = vmax.f32 %v72, 0.0
  %v133 = vmax.f32 %v73, 0.0
  %v134 = vmax.f32 %v74, 0.0
  %v135 = vmax.f32 %v75, 0.0
  %v136 = vmax.f32 %v76, 0.0
  %v137 = vmax.f32 %v77, 0.0
  %v138 = vmax.f32 %v78, 0.0
  %v139 = vmax.f32 %v79, 0.0
  %v140 = vmax.f32 %v80, 0.0
  %v141 = vmax.f32 %v81, 0.0
  %v142 = vmax.f32 %v82, 0.0
  %v143 = vmax.f32 %v83, 0.0
  %v144 = vmax.f32 %v84, 0.0
  %v145 = vmax.f32 %v85, 0.0
  %v146 = vmax.f32 %v86, 0.0
  %v147 = vmax.f32 %v87, 0.0
  %v148 = vmax.f32 %v88, 0.0
  %v149 = vmax.f32 %v89, 0.0
  %v150 = vmax.f32 %v90, 0.0
  %v151 = vmax.f32 %v91, 0.0
  %v152 = vmax.f32 %v92, 0.0
  %v153 = vmax.f32 %v93, 0.0
  %v154 = vmax.f32 %v94, 0.0
  %v155 = vmax.f32 %v95, 0.0
  %v156 = vmax.f32 %v96, 0.0
  %v157 = vmax.f32 %v97, 0.0
  %v158 = vmax.f32 %v98, 0.0
  %v159 = vmax.f32 %v99, 0.0
  %v160 = vmax.f32 %v100, 0.0
  %v161 = vmax.f32 %v101, 0.0
  %v162 = vmax.f32 %v102, 0.0
  %v163 = vmax.f32 %v103, 0.0
  %v164 = vmax.f32 %v104, 0.0
  %v165 = vmax.f32 %v105, 0.0
  %v166 = vmax.f32 %v106, 0.0
  %v167 = vmax.f32 %v107, 0.0
  %v168 = vmax.f32 %v108, 0.0
  %v169 = vmax.f32 %v109, 0.0
  %v170 = vmax.f32 %v110, 0.0
  %v171 = vmax.f32 %v111, 0.0
  %v172 = vmax.f32 %v112, 0.0
  %v173 = vmax.f32 %v113, 0.0
  %v174 = vmax.f32 %v114, 0.0
  %v175 = vmax.f32 %v115, 0.0
  %v176 = vmax.f32 %v116, 0.0
  %v177 = vmax.f32 %v117, 0.0
  %v178 = vmax.f32 %v118, 0.0
  %v179 = vmax.f32 %v119, 0.0
  %v180 = vpack.c.bf16 %v135, %v120
  %v181 = vpack.c.bf16 %v136, %v121
  %v182 = vpack.c.bf16 %v137, %v122
  %v183 = vpack.c.bf16 %v138, %v123
  %v184 = vpack.c.bf16 %v139, %v124
  %v185 = vpack.c.bf16 %v140, %v125
  %v186 = vpack.c.bf16 %v141, %v126
  %v187 = vpack.c.bf16 %v142, %v127
  %v188 = vpack.c.bf16 %v143, %v128
  %v189 = vpack.c.bf16 %v144, %v129
  %v190 = vpack.c.bf16 %v145, %v130
  %v191 = vpack.c.bf16 %v146, %v131
  %v192 = vpack.c.bf16 %v147, %v132
  %v193 = vpack.c.bf16 %v148, %v133
  %v194 = vpack.c.bf16 %v149, %v134
  %v195 = vpack.c.bf16 %v165, %v150
  %v196 = vpack.c.bf16 %v166, %v151
  %v197 = vpack.c.bf16 %v167, %v152
  %v198 = vpack.c.bf16 %v168, %v153
  %v199 = vpack.c.bf16 %v169, %v154
  %v200 = vpack.c.bf16 %v170, %v155
  %v201 = vpack.c.bf16 %v171, %v156
  %v202 = vpack.c.bf16 %v172, %v157
  %v203 = vpack.c.bf16 %v173, %v158
  %v204 = vpack.c.bf16 %v174, %v159
  %v205 = vpack.c.bf16 %v175, %v160
  %v206 = vpack.c.bf16 %v176, %v161
  %v207 = vpack.c.bf16 %v177, %v162
  %v208 = vpack.c.bf16 %v178, %v163
  %v209 = vpack.c.bf16 %v179, %v164
  %v210 = vld [vmem:[%s1] sm:$0xf]
  %v211 = vld [vmem:[%s1 + $0x4] sm:$0xf]
  %v212 = vld [vmem:[%s1 + $0x8] sm:$0xf]
  %v213 = vld [vmem:[%s1 + $0xc] sm:$0xf]
  %v214 = vld [vmem:[%s1 + $0x10] sm:$0xf]
  %v215 = vld [vmem:[%s1 + $0x14] sm:$0xf]
  %v216 = vld [vmem:[%s1 + $0x18] sm:$0xf]
  %v217 = vld [vmem:[%s1 + $0x1c] sm:$0xf]
  %v218 = vld [vmem:[%s1 + $0x20] sm:$0xf]
  %v219 = vld [vmem:[%s1 + $0x24] sm:$0xf]
  %v220 = vld [vmem:[%s1 + $0x28] sm:$0xf]
  %v221 = vld [vmem:[%s1 + $0x2c] sm:$0xf]
  %v222 = vld [vmem:[%s1 + $0x30] sm:$0xf]
  %v223 = vld [vmem:[%s1 + $0x34] sm:$0xf]
  %v224 = vld [vmem:[%s1 + $0x38] sm:$0xf]
  %v225 = vld [vmem:[%s1 + $0x3c] sm:$0xf]
  %v226 = vld [vmem:[%s1 + $0x40] sm:$0xf]
  %v227 = vld [vmem:[%s1 + $0x44] sm:$0xf]
  %v228 = vld [vmem:[%s1 + $0x48] sm:$0xf]
  %v229 = vld [vmem:[%s1 + $0x4c] sm:$0xf]
  %v230 = vld [vmem:[%s1 + $0x50] sm:$0xf]
  %v231 = vld [vmem:[%s1 + $0x54] sm:$0xf]
  %v232 = vld [vmem:[%s1 + $0x58] sm:$0xf]
  %v233 = vld [vmem:[%s1 + $0x5c] sm:$0xf]
  %v234 = vld [vmem:[%s1 + $0x60] sm:$0xf]
  %v235 = vld [vmem:[%s1 + $0x64] sm:$0xf]
  %v236 = vld [vmem:[%s1 + $0x68] sm:$0xf]
  %v237 = vld [vmem:[%s1 + $0x6c] sm:$0xf]
  %v238 = vld [vmem:[%s1 + $0x70] sm:$0xf]
  %v239 = vld [vmem:[%s1 + $0x74] sm:$0xf]
  %v240 = vld [vmem:[%s1 + $0x78] sm:$0xf]
  %v241 = vld [vmem:[%s1 + $0x7c] sm:$0xf]
  %v242 = vld [vmem:[%s1 + $0x80] sm:$0xf]
  %v243 = vld [vmem:[%s1 + $0x84] sm:$0xf]
  %v244 = vld [vmem:[%s1 + $0x88] sm:$0xf]
  %v245 = vld [vmem:[%s1 + $0x8c] sm:$0xf]
  %v246 = vld [vmem:[%s1 + $0x90] sm:$0xf]
  %v247 = vld [vmem:[%s1 + $0x94] sm:$0xf]
  %v248 = vld [vmem:[%s1 + $0x98] sm:$0xf]
  %v249 = vld [vmem:[%s1 + $0x9c] sm:$0xf]
  %v250 = vld [vmem:[%s1 + $0xa0] sm:$0xf]
  %v251 = vld [vmem:[%s1 + $0xa4] sm:$0xf]
  %v252 = vld [vmem:[%s1 + $0xa8] sm:$0xf]
  %v253 = vld [vmem:[%s1 + $0xac] sm:$0xf]
  %v254 = vld [vmem:[%s1 + $0xb0] sm:$0xf]
  %v255 = vld [vmem:[%s1 + $0xb4] sm:$0xf]
  %v256 = vld [vmem:[%s1 + $0xb8] sm:$0xf]
  %v257 = vld [vmem:[%s1 + $0xbc] sm:$0xf]
  %v258 = vld [vmem:[%s1 + $0xc0] sm:$0xf]
  %v259 = vld [vmem:[%s1 + $0xc4] sm:$0xf]
  %v260 = vld [vmem:[%s1 + $0xc8] sm:$0xf]
  %v261 = vld [vmem:[%s1 + $0xcc] sm:$0xf]
  %v262 = vld [vmem:[%s1 + $0xd0] sm:$0xf]
  %v263 = vld [vmem:[%s1 + $0xd4] sm:$0xf]
  %v264 = vld [vmem:[%s1 + $0xd8] sm:$0xf]
  %v265 = vld [vmem:[%s1 + $0xdc] sm:$0xf]
  %v266 = vld [vmem:[%s1 + $0xe0] sm:$0xf]
  %v267 = vld [vmem:[%s1 + $0xe4] sm:$0xf]
  %v268 = vld [vmem:[%s1 + $0xe8] sm:$0xf]
  %v269 = vld [vmem:[%s1 + $0xec] sm:$0xf]
  %v270 = vld [vmem:[%s1 + $0xf0] sm:$0xf]
  %v271 = vld [vmem:[%s1 + $0xf4] sm:$0xf]
  %v272 = vld [vmem:[%s1 + $0xf8] sm:$0xf]
  %v273 = vld [vmem:[%s1 + $0xfc] sm:$0xf]
  %v274 = vld [vmem:[%s1 + $0x100] sm:$0xf]
  %v275 = vld [vmem:[%s1 + $0x104] sm:$0xf]
  %v276 = vld [vmem:[%s1 + $0x108] sm:$0xf]
  %v277 = vld [vmem:[%s1 + $0x10c] sm:$0xf]
  %v278 = vld [vmem:[%s1 + $0x110] sm:$0xf]
  %v279 = vld [vmem:[%s1 + $0x114] sm:$0xf]
  %v280 = vld [vmem:[%s1 + $0x118] sm:$0xf]
  %v281 = vld [vmem:[%s1 + $0x11c] sm:$0xf]
  %v282 = vld [vmem:[%s1 + $0x120] sm:$0xf]
  %v283 = vld [vmem:[%s1 + $0x124] sm:$0xf]
  %v284 = vld [vmem:[%s1 + $0x128] sm:$0xf]
  %v285 = vld [vmem:[%s1 + $0x12c] sm:$0xf]
  %v286 = vld [vmem:[%s1 + $0x130] sm:$0xf]
  %v287 = vld [vmem:[%s1 + $0x134] sm:$0xf]
  %v288 = vld [vmem:[%s1 + $0x138] sm:$0xf]
  %v289 = vld [vmem:[%s1 + $0x13c] sm:$0xf]
  %v290 = vld [vmem:[%s1 + $0x140] sm:$0xf]
  %v291 = vld [vmem:[%s1 + $0x144] sm:$0xf]
  %v292 = vld [vmem:[%s1 + $0x148] sm:$0xf]
  %v293 = vld [vmem:[%s1 + $0x14c] sm:$0xf]
  %v294 = vld [vmem:[%s1 + $0x150] sm:$0xf]
  %v295 = vld [vmem:[%s1 + $0x154] sm:$0xf]
  %v296 = vld [vmem:[%s1 + $0x158] sm:$0xf]
  %v297 = vld [vmem:[%s1 + $0x15c] sm:$0xf]
  %v298 = vld [vmem:[%s1 + $0x160] sm:$0xf]
  %v299 = vld [vmem:[%s1 + $0x164] sm:$0xf]
  %v300 = vld [vmem:[%s1 + $0x168] sm:$0xf]
  %v301 = vld [vmem:[%s1 + $0x16c] sm:$0xf]
  %v302 = vld [vmem:[%s1 + $0x170] sm:$0xf]
  %v303 = vld [vmem:[%s1 + $0x174] sm:$0xf]
  %v304 = vld [vmem:[%s1 + $0x178] sm:$0xf]
  %v305 = vld [vmem:[%s1 + $0x17c] sm:$0xf]
  %v306 = vld [vmem:[%s1 + $0x180] sm:$0xf]
  %v307 = vld [vmem:[%s1 + $0x184] sm:$0xf]
  %v308 = vld [vmem:[%s1 + $0x188] sm:$0xf]
  %v309 = vld [vmem:[%s1 + $0x18c] sm:$0xf]
  %v310 = vld [vmem:[%s1 + $0x190] sm:$0xf]
  %v311 = vld [vmem:[%s1 + $0x194] sm:$0xf]
  %v312 = vld [vmem:[%s1 + $0x198] sm:$0xf]
  %v313 = vld [vmem:[%s1 + $0x19c] sm:$0xf]
  %v314 = vld [vmem:[%s1 + $0x1a0] sm:$0xf]
  %v315 = vld [vmem:[%s1 + $0x1a4] sm:$0xf]
  %v316 = vld [vmem:[%s1 + $0x1a8] sm:$0xf]
  %v317 = vld [vmem:[%s1 + $0x1ac] sm:$0xf]
  %v318 = vld [vmem:[%s1 + $0x1b0] sm:$0xf]
  %v319 = vld [vmem:[%s1 + $0x1b4] sm:$0xf]
  %v320 = vld [vmem:[%s1 + $0x1b8] sm:$0xf]
  %v321 = vld [vmem:[%s1 + $0x1bc] sm:$0xf]
  %v322 = vld [vmem:[%s1 + $0x1c0] sm:$0xf]
  %v323 = vld [vmem:[%s1 + $0x1c4] sm:$0xf]
  %v324 = vld [vmem:[%s1 + $0x1c8] sm:$0xf]
  %v325 = vld [vmem:[%s1 + $0x1cc] sm:$0xf]
  %v326 = vld [vmem:[%s1 + $0x1d0] sm:$0xf]
  %v327 = vld [vmem:[%s1 + $0x1d4] sm:$0xf]
  %v328 = vld [vmem:[%s1 + $0x1d8] sm:$0xf]
  %v329 = vld [vmem:[%s1 + $0x1dc] sm:$0xf]
  %v330 = vld [vmem:[%s1 + $0x1e0] sm:$0xf]
  %v331 = vld [vmem:[%s1 + $0x1e4] sm:$0xf]
  %v332 = vld [vmem:[%s1 + $0x1e8] sm:$0xf]
  %v333 = vld [vmem:[%s1 + $0x1ec] sm:$0xf]
  %v334 = vld [vmem:[%s1 + $0x1f0] sm:$0xf]
  %v335 = vld [vmem:[%s1 + $0x1f4] sm:$0xf]
  %v336 = vld [vmem:[%s1 + $0x1f8] sm:$0xf]
  %v337 = vld [vmem:[%s1 + $0x1fc] sm:$0xf]
  %v338 = vld [vmem:[%s1 + $0x200] sm:$0xf]
  %v339 = vld [vmem:[%s1 + $0x204] sm:$0xf]
  %v340 = vld [vmem:[%s1 + $0x208] sm:$0xf]
  %v341 = vld [vmem:[%s1 + $0x20c] sm:$0xf]
  %v342 = vld [vmem:[%s1 + $0x210] sm:$0xf]
  %v343 = vld [vmem:[%s1 + $0x214] sm:$0xf]
  %v344 = vld [vmem:[%s1 + $0x218] sm:$0xf]
  %v345 = vld [vmem:[%s1 + $0x21c] sm:$0xf]
  %v346 = vld [vmem:[%s1 + $0x220] sm:$0xf]
  %v347 = vld [vmem:[%s1 + $0x224] sm:$0xf]
  %v348 = vld [vmem:[%s1 + $0x228] sm:$0xf]
  %v349 = vld [vmem:[%s1 + $0x22c] sm:$0xf]
  %v350 = vld [vmem:[%s1 + $0x230] sm:$0xf]
  %v351 = vld [vmem:[%s1 + $0x234] sm:$0xf]
  %v352 = vld [vmem:[%s1 + $0x238] sm:$0xf]
  %v353 = vld [vmem:[%s1 + $0x23c] sm:$0xf]
  %v354 = vld [vmem:[%s1 + $0x240] sm:$0xf]
  %v355 = vld [vmem:[%s1 + $0x244] sm:$0xf]
  %v356 = vld [vmem:[%s1 + $0x248] sm:$0xf]
  %v357 = vld [vmem:[%s1 + $0x24c] sm:$0xf]
  %v358 = vld [vmem:[%s1 + $0x250] sm:$0xf]
  %v359 = vld [vmem:[%s1 + $0x254] sm:$0xf]
  %v360 = vld [vmem:[%s1 + $0x258] sm:$0xf]
  %v361 = vld [vmem:[%s1 + $0x25c] sm:$0xf]
  %v362 = vld [vmem:[%s1 + $0x260] sm:$0xf]
  %v363 = vld [vmem:[%s1 + $0x264] sm:$0xf]
  %v364 = vld [vmem:[%s1 + $0x268] sm:$0xf]
  %v365 = vld [vmem:[%s1 + $0x26c] sm:$0xf]
  %v366 = vld [vmem:[%s1 + $0x270] sm:$0xf]
  %v367 = vld [vmem:[%s1 + $0x274] sm:$0xf]
  %v368 = vld [vmem:[%s1 + $0x278] sm:$0xf]
  %v369 = vld [vmem:[%s1 + $0x27c] sm:$0xf]
  %v370 = vld [vmem:[%s1 + $0x280] sm:$0xf]
  %v371 = vld [vmem:[%s1 + $0x284] sm:$0xf]
  %v372 = vld [vmem:[%s1 + $0x288] sm:$0xf]
  %v373 = vld [vmem:[%s1 + $0x28c] sm:$0xf]
  %v374 = vld [vmem:[%s1 + $0x290] sm:$0xf]
  %v375 = vld [vmem:[%s1 + $0x294] sm:$0xf]
  %v376 = vld [vmem:[%s1 + $0x298] sm:$0xf]
  %v377 = vld [vmem:[%s1 + $0x29c] sm:$0xf]
  %v378 = vld [vmem:[%s1 + $0x2a0] sm:$0xf]
  %v379 = vld [vmem:[%s1 + $0x2a4] sm:$0xf]
  %v380 = vld [vmem:[%s1 + $0x2a8] sm:$0xf]
  %v381 = vld [vmem:[%s1 + $0x2ac] sm:$0xf]
  %v382 = vld [vmem:[%s1 + $0x2b0] sm:$0xf]
  %v383 = vld [vmem:[%s1 + $0x2b4] sm:$0xf]
  %v384 = vld [vmem:[%s1 + $0x2b8] sm:$0xf]
  %v385 = vld [vmem:[%s1 + $0x2bc] sm:$0xf]
  %v386 = vld [vmem:[%s1 + $0x2c0] sm:$0xf]
  %v387 = vld [vmem:[%s1 + $0x2c4] sm:$0xf]
  %v388 = vld [vmem:[%s1 + $0x2c8] sm:$0xf]
  %v389 = vld [vmem:[%s1 + $0x2cc] sm:$0xf]
  %v390 = vld [vmem:[%s1 + $0x2d0] sm:$0xf]
  %v391 = vld [vmem:[%s1 + $0x2d4] sm:$0xf]
  %v392 = vld [vmem:[%s1 + $0x2d8] sm:$0xf]
  %v393 = vld [vmem:[%s1 + $0x2dc] sm:$0xf]
  %v394 = vld [vmem:[%s1 + $0x2e0] sm:$0xf]
  %v395 = vld [vmem:[%s1 + $0x2e4] sm:$0xf]
  %v396 = vld [vmem:[%s1 + $0x2e8] sm:$0xf]
  %v397 = vld [vmem:[%s1 + $0x2ec] sm:$0xf]
  %v398 = vld [vmem:[%s1 + $0x2f0] sm:$0xf]
  %v399 = vld [vmem:[%s1 + $0x2f4] sm:$0xf]
  %v400 = vld [vmem:[%s1 + $0x2f8] sm:$0xf]
  %v401 = vld [vmem:[%s1 + $0x2fc] sm:$0xf]
  %v402 = vld [vmem:[%s1 + $0x300] sm:$0xf]
  %v403 = vld [vmem:[%s1 + $0x304] sm:$0xf]
  %v404 = vld [vmem:[%s1 + $0x308] sm:$0xf]
  %v405 = vld [vmem:[%s1 + $0x30c] sm:$0xf]
  %v406 = vld [vmem:[%s1 + $0x310] sm:$0xf]
  %v407 = vld [vmem:[%s1 + $0x314] sm:$0xf]
  %v408 = vld [vmem:[%s1 + $0x318] sm:$0xf]
  %v409 = vld [vmem:[%s1 + $0x31c] sm:$0xf]
  %v410 = vld [vmem:[%s1 + $0x320] sm:$0xf]
  %v411 = vld [vmem:[%s1 + $0x324] sm:$0xf]
  %v412 = vld [vmem:[%s1 + $0x328] sm:$0xf]
  %v413 = vld [vmem:[%s1 + $0x32c] sm:$0xf]
  %v414 = vld [vmem:[%s1 + $0x330] sm:$0xf]
  %v415 = vld [vmem:[%s1 + $0x334] sm:$0xf]
  %v416 = vld [vmem:[%s1 + $0x338] sm:$0xf]
  %v417 = vld [vmem:[%s1 + $0x33c] sm:$0xf]
  %v418 = vld [vmem:[%s1 + $0x340] sm:$0xf]
  %v419 = vld [vmem:[%s1 + $0x344] sm:$0xf]
  %v420 = vld [vmem:[%s1 + $0x348] sm:$0xf]
  %v421 = vld [vmem:[%s1 + $0x34c] sm:$0xf]
  %v422 = vld [vmem:[%s1 + $0x350] sm:$0xf]
  %v423 = vld [vmem:[%s1 + $0x354] sm:$0xf]
  %v424 = vld [vmem:[%s1 + $0x358] sm:$0xf]
  %v425 = vld [vmem:[%s1 + $0x35c] sm:$0xf]
  %v426 = vld [vmem:[%s1 + $0x360] sm:$0xf]
  %v427 = vld [vmem:[%s1 + $0x364] sm:$0xf]
  %v428 = vld [vmem:[%s1 + $0x368] sm:$0xf]
  %v429 = vld [vmem:[%s1 + $0x36c] sm:$0xf]
  %v430 = vld [vmem:[%s1 + $0x370] sm:$0xf]
  %v431 = vld [vmem:[%s1 + $0x374] sm:$0xf]
  %v432 = vld [vmem:[%s1 + $0x378] sm:$0xf]
  %v433 = vld [vmem:[%s1 + $0x37c] sm:$0xf]
  %v434 = vld [vmem:[%s1 + $0x380] sm:$0xf]
  %v435 = vld [vmem:[%s1 + $0x384] sm:$0xf]
  %v436 = vld [vmem:[%s1 + $0x388] sm:$0xf]
  %v437 = vld [vmem:[%s1 + $0x38c] sm:$0xf]
  %v438 = vld [vmem:[%s1 + $0x390] sm:$0xf]
  %v439 = vld [vmem:[%s1 + $0x394] sm:$0xf]
  %v440 = vld [vmem:[%s1 + $0x398] sm:$0xf]
  %v441 = vld [vmem:[%s1 + $0x39c] sm:$0xf]
  %v442 = vld [vmem:[%s1 + $0x3a0] sm:$0xf]
  %v443 = vld [vmem:[%s1 + $0x3a4] sm:$0xf]
  %v444 = vld [vmem:[%s1 + $0x3a8] sm:$0xf]
  %v445 = vld [vmem:[%s1 + $0x3ac] sm:$0xf]
  %v446 = vld [vmem:[%s1 + $0x3b0] sm:$0xf]
  %v447 = vld [vmem:[%s1 + $0x3b4] sm:$0xf]
  %v448 = vld [vmem:[%s1 + $0x3b8] sm:$0xf]
  %v449 = vld [vmem:[%s1 + $0x3bc] sm:$0xf]
  %v690 = vunpack.c.l.b16 %v210
  %v691 = vunpack.c.l.b16 %v211
  %v692 = vunpack.c.l.b16 %v212
  %v693 = vunpack.c.l.b16 %v213
  %v694 = vunpack.c.l.b16 %v214
  %v695 = vunpack.c.l.b16 %v215
  %v696 = vunpack.c.l.b16 %v216
  %v697 = vunpack.c.l.b16 %v217
  %v698 = vunpack.c.l.b16 %v218
  %v699 = vunpack.c.l.b16 %v219
  %v700 = vunpack.c.l.b16 %v220
  %v701 = vunpack.c.l.b16 %v221
  %v702 = vunpack.c.l.b16 %v222
  %v703 = vunpack.c.l.b16 %v223
  %v704 = vunpack.c.l.b16 %v224
  %v705 = vunpack.c.l.b16 %v225
  %v706 = vunpack.c.l.b16 %v226
  %v707 = vunpack.c.l.b16 %v227
  %v708 = vunpack.c.l.b16 %v228
  %v709 = vunpack.c.l.b16 %v229
  %v710 = vunpack.c.l.b16 %v230
  %v711 = vunpack.c.l.b16 %v231
  %v712 = vunpack.c.l.b16 %v232
  %v713 = vunpack.c.l.b16 %v233
  %v714 = vunpack.c.l.b16 %v234
  %v715 = vunpack.c.l.b16 %v235
  %v716 = vunpack.c.l.b16 %v236
  %v717 = vunpack.c.l.b16 %v237
  %v718 = vunpack.c.l.b16 %v238
  %v719 = vunpack.c.l.b16 %v239
  %v720 = vunpack.c.l.b16 %v240
  %v721 = vunpack.c.l.b16 %v241
  %v722 = vunpack.c.l.b16 %v242
  %v723 = vunpack.c.l.b16 %v243
  %v724 = vunpack.c.l.b16 %v244
  %v725 = vunpack.c.l.b16 %v245
  %v726 = vunpack.c.l.b16 %v246
  %v727 = vunpack.c.l.b16 %v247
  %v728 = vunpack.c.l.b16 %v248
  %v729 = vunpack.c.l.b16 %v249
  %v730 = vunpack.c.l.b16 %v250
  %v731 = vunpack.c.l.b16 %v251
  %v732 = vunpack.c.l.b16 %v252
  %v733 = vunpack.c.l.b16 %v253
  %v734 = vunpack.c.l.b16 %v254
  %v735 = vunpack.c.l.b16 %v255
  %v736 = vunpack.c.l.b16 %v256
  %v737 = vunpack.c.l.b16 %v257
  %v738 = vunpack.c.l.b16 %v258
  %v739 = vunpack.c.l.b16 %v259
  %v740 = vunpack.c.l.b16 %v260
  %v741 = vunpack.c.l.b16 %v261
  %v742 = vunpack.c.l.b16 %v262
  %v743 = vunpack.c.l.b16 %v263
  %v744 = vunpack.c.l.b16 %v264
  %v745 = vunpack.c.l.b16 %v265
  %v746 = vunpack.c.l.b16 %v266
  %v747 = vunpack.c.l.b16 %v267
  %v748 = vunpack.c.l.b16 %v268
  %v749 = vunpack.c.l.b16 %v269
  %v750 = vunpack.c.l.b16 %v270
  %v751 = vunpack.c.l.b16 %v271
  %v752 = vunpack.c.l.b16 %v272
  %v753 = vunpack.c.l.b16 %v273
  %v754 = vunpack.c.l.b16 %v274
  %v755 = vunpack.c.l.b16 %v275
  %v756 = vunpack.c.l.b16 %v276
  %v757 = vunpack.c.l.b16 %v277
  %v758 = vunpack.c.l.b16 %v278
  %v759 = vunpack.c.l.b16 %v279
  %v760 = vunpack.c.l.b16 %v280
  %v761 = vunpack.c.l.b16 %v281
  %v762 = vunpack.c.l.b16 %v282
  %v763 = vunpack.c.l.b16 %v283
  %v764 = vunpack.c.l.b16 %v284
  %v765 = vunpack.c.l.b16 %v285
  %v766 = vunpack.c.l.b16 %v286
  %v767 = vunpack.c.l.b16 %v287
  %v768 = vunpack.c.l.b16 %v288
  %v769 = vunpack.c.l.b16 %v289
  %v770 = vunpack.c.l.b16 %v290
  %v771 = vunpack.c.l.b16 %v291
  %v772 = vunpack.c.l.b16 %v292
  %v773 = vunpack.c.l.b16 %v293
  %v774 = vunpack.c.l.b16 %v294
  %v775 = vunpack.c.l.b16 %v295
  %v776 = vunpack.c.l.b16 %v296
  %v777 = vunpack.c.l.b16 %v297
  %v778 = vunpack.c.l.b16 %v298
  %v779 = vunpack.c.l.b16 %v299
  %v780 = vunpack.c.l.b16 %v300
  %v781 = vunpack.c.l.b16 %v301
  %v782 = vunpack.c.l.b16 %v302
  %v783 = vunpack.c.l.b16 %v303
  %v784 = vunpack.c.l.b16 %v304
  %v785 = vunpack.c.l.b16 %v305
  %v786 = vunpack.c.l.b16 %v306
  %v787 = vunpack.c.l.b16 %v307
  %v788 = vunpack.c.l.b16 %v308
  %v789 = vunpack.c.l.b16 %v309
  %v790 = vunpack.c.l.b16 %v310
  %v791 = vunpack.c.l.b16 %v311
  %v792 = vunpack.c.l.b16 %v312
  %v793 = vunpack.c.l.b16 %v313
  %v794 = vunpack.c.l.b16 %v314
  %v795 = vunpack.c.l.b16 %v315
  %v796 = vunpack.c.l.b16 %v316
  %v797 = vunpack.c.l.b16 %v317
  %v798 = vunpack.c.l.b16 %v318
  %v799 = vunpack.c.l.b16 %v319
  %v800 = vunpack.c.l.b16 %v320
  %v801 = vunpack.c.l.b16 %v321
  %v802 = vunpack.c.l.b16 %v322
  %v803 = vunpack.c.l.b16 %v323
  %v804 = vunpack.c.l.b16 %v324
  %v805 = vunpack.c.l.b16 %v325
  %v806 = vunpack.c.l.b16 %v326
  %v807 = vunpack.c.l.b16 %v327
  %v808 = vunpack.c.l.b16 %v328
  %v809 = vunpack.c.l.b16 %v329
  %v810 = vunpack.c.l.b16 %v330
  %v811 = vunpack.c.l.b16 %v331
  %v812 = vunpack.c.l.b16 %v332
  %v813 = vunpack.c.l.b16 %v333
  %v814 = vunpack.c.l.b16 %v334
  %v815 = vunpack.c.l.b16 %v335
  %v816 = vunpack.c.l.b16 %v336
  %v817 = vunpack.c.l.b16 %v337
  %v818 = vunpack.c.l.b16 %v338
  %v819 = vunpack.c.l.b16 %v339
  %v820 = vunpack.c.l.b16 %v340
  %v821 = vunpack.c.l.b16 %v341
  %v822 = vunpack.c.l.b16 %v342
  %v823 = vunpack.c.l.b16 %v343
  %v824 = vunpack.c.l.b16 %v344
  %v825 = vunpack.c.l.b16 %v345
  %v826 = vunpack.c.l.b16 %v346
  %v827 = vunpack.c.l.b16 %v347
  %v828 = vunpack.c.l.b16 %v348
  %v829 = vunpack.c.l.b16 %v349
  %v830 = vunpack.c.l.b16 %v350
  %v831 = vunpack.c.l.b16 %v351
  %v832 = vunpack.c.l.b16 %v352
  %v833 = vunpack.c.l.b16 %v353
  %v834 = vunpack.c.l.b16 %v354
  %v835 = vunpack.c.l.b16 %v355
  %v836 = vunpack.c.l.b16 %v356
  %v837 = vunpack.c.l.b16 %v357
  %v838 = vunpack.c.l.b16 %v358
  %v839 = vunpack.c.l.b16 %v359
  %v840 = vunpack.c.l.b16 %v360
  %v841 = vunpack.c.l.b16 %v361
  %v842 = vunpack.c.l.b16 %v362
  %v843 = vunpack.c.l.b16 %v363
  %v844 = vunpack.c.l.b16 %v364
  %v845 = vunpack.c.l.b16 %v365
  %v846 = vunpack.c.l.b16 %v366
  %v847 = vunpack.c.l.b16 %v367
  %v848 = vunpack.c.l.b16 %v368
  %v849 = vunpack.c.l.b16 %v369
  %v850 = vunpack.c.l.b16 %v370
  %v851 = vunpack.c.l.b16 %v371
  %v852 = vunpack.c.l.b16 %v372
  %v853 = vunpack.c.l.b16 %v373
  %v854 = vunpack.c.l.b16 %v374
  %v855 = vunpack.c.l.b16 %v375
  %v856 = vunpack.c.l.b16 %v376
  %v857 = vunpack.c.l.b16 %v377
  %v858 = vunpack.c.l.b16 %v378
  %v859 = vunpack.c.l.b16 %v379
  %v860 = vunpack.c.l.b16 %v380
  %v861 = vunpack.c.l.b16 %v381
  %v862 = vunpack.c.l.b16 %v382
  %v863 = vunpack.c.l.b16 %v383
  %v864 = vunpack.c.l.b16 %v384
  %v865 = vunpack.c.l.b16 %v385
  %v866 = vunpack.c.l.b16 %v386
  %v867 = vunpack.c.l.b16 %v387
  %v868 = vunpack.c.l.b16 %v388
  %v869 = vunpack.c.l.b16 %v389
  %v870 = vunpack.c.l.b16 %v390
  %v871 = vunpack.c.l.b16 %v391
  %v872 = vunpack.c.l.b16 %v392
  %v873 = vunpack.c.l.b16 %v393
  %v874 = vunpack.c.l.b16 %v394
  %v875 = vunpack.c.l.b16 %v395
  %v876 = vunpack.c.l.b16 %v396
  %v877 = vunpack.c.l.b16 %v397
  %v878 = vunpack.c.l.b16 %v398
  %v879 = vunpack.c.l.b16 %v399
  %v880 = vunpack.c.l.b16 %v400
  %v881 = vunpack.c.l.b16 %v401
  %v882 = vunpack.c.l.b16 %v402
  %v883 = vunpack.c.l.b16 %v403
  %v884 = vunpack.c.l.b16 %v404
  %v885 = vunpack.c.l.b16 %v405
  %v886 = vunpack.c.l.b16 %v406
  %v887 = vunpack.c.l.b16 %v407
  %v888 = vunpack.c.l.b16 %v408
  %v889 = vunpack.c.l.b16 %v409
  %v890 = vunpack.c.l.b16 %v410
  %v891 = vunpack.c.l.b16 %v411
  %v892 = vunpack.c.l.b16 %v412
  %v893 = vunpack.c.l.b16 %v413
  %v894 = vunpack.c.l.b16 %v414
  %v895 = vunpack.c.l.b16 %v415
  %v896 = vunpack.c.l.b16 %v416
  %v897 = vunpack.c.l.b16 %v417
  %v898 = vunpack.c.l.b16 %v418
  %v899 = vunpack.c.l.b16 %v419
  %v900 = vunpack.c.l.b16 %v420
  %v901 = vunpack.c.l.b16 %v421
  %v902 = vunpack.c.l.b16 %v422
  %v903 = vunpack.c.l.b16 %v423
  %v904 = vunpack.c.l.b16 %v424
  %v905 = vunpack.c.l.b16 %v425
  %v906 = vunpack.c.l.b16 %v426
  %v907 = vunpack.c.l.b16 %v427
  %v908 = vunpack.c.l.b16 %v428
  %v909 = vunpack.c.l.b16 %v429
  %v910 = vunpack.c.l.b16 %v430
  %v911 = vunpack.c.l.b16 %v431
  %v912 = vunpack.c.l.b16 %v432
  %v913 = vunpack.c.l.b16 %v433
  %v914 = vunpack.c.l.b16 %v434
  %v915 = vunpack.c.l.b16 %v435
  %v916 = vunpack.c.l.b16 %v436
  %v917 = vunpack.c.l.b16 %v437
  %v918 = vunpack.c.l.b16 %v438
  %v919 = vunpack.c.l.b16 %v439
  %v920 = vunpack.c.l.b16 %v440
  %v921 = vunpack.c.l.b16 %v441
  %v922 = vunpack.c.l.b16 %v442
  %v923 = vunpack.c.l.b16 %v443
  %v924 = vunpack.c.l.b16 %v444
  %v925 = vunpack.c.l.b16 %v445
  %v926 = vunpack.c.l.b16 %v446
  %v927 = vunpack.c.l.b16 %v447
  %v928 = vunpack.c.l.b16 %v448
  %v929 = vunpack.c.l.b16 %v449
  %v930 = vpack.c.b16 %v691, %v690
  %v931 = vpack.c.b16 %v693, %v692
  %v932 = vpack.c.b16 %v695, %v694
  %v933 = vpack.c.b16 %v697, %v696
  %v934 = vpack.c.b16 %v699, %v698
  %v935 = vpack.c.b16 %v701, %v700
  %v936 = vpack.c.b16 %v703, %v702
  %v937 = vpack.c.b16 %v705, %v704
  %v938 = vpack.c.b16 %v707, %v706
  %v939 = vpack.c.b16 %v709, %v708
  %v940 = vpack.c.b16 %v711, %v710
  %v941 = vpack.c.b16 %v713, %v712
  %v942 = vpack.c.b16 %v715, %v714
  %v943 = vpack.c.b16 %v717, %v716
  %v944 = vpack.c.b16 %v719, %v718
  %v945 = vpack.c.b16 %v721, %v720
  %v946 = vpack.c.b16 %v723, %v722
  %v947 = vpack.c.b16 %v725, %v724
  %v948 = vpack.c.b16 %v727, %v726
  %v949 = vpack.c.b16 %v729, %v728
  %v950 = vpack.c.b16 %v731, %v730
  %v951 = vpack.c.b16 %v733, %v732
  %v952 = vpack.c.b16 %v735, %v734
  %v953 = vpack.c.b16 %v737, %v736
  %v954 = vpack.c.b16 %v739, %v738
  %v955 = vpack.c.b16 %v741, %v740
  %v956 = vpack.c.b16 %v743, %v742
  %v957 = vpack.c.b16 %v745, %v744
  %v958 = vpack.c.b16 %v747, %v746
  %v959 = vpack.c.b16 %v749, %v748
  %v960 = vpack.c.b16 %v751, %v750
  %v961 = vpack.c.b16 %v753, %v752
  %v962 = vpack.c.b16 %v755, %v754
  %v963 = vpack.c.b16 %v757, %v756
  %v964 = vpack.c.b16 %v759, %v758
  %v965 = vpack.c.b16 %v761, %v760
  %v966 = vpack.c.b16 %v763, %v762
  %v967 = vpack.c.b16 %v765, %v764
  %v968 = vpack.c.b16 %v767, %v766
  %v969 = vpack.c.b16 %v769, %v768
  %v970 = vpack.c.b16 %v771, %v770
  %v971 = vpack.c.b16 %v773, %v772
  %v972 = vpack.c.b16 %v775, %v774
  %v973 = vpack.c.b16 %v777, %v776
  %v974 = vpack.c.b16 %v779, %v778
  %v975 = vpack.c.b16 %v781, %v780
  %v976 = vpack.c.b16 %v783, %v782
  %v977 = vpack.c.b16 %v785, %v784
  %v978 = vpack.c.b16 %v787, %v786
  %v979 = vpack.c.b16 %v789, %v788
  %v980 = vpack.c.b16 %v791, %v790
  %v981 = vpack.c.b16 %v793, %v792
  %v982 = vpack.c.b16 %v795, %v794
  %v983 = vpack.c.b16 %v797, %v796
  %v984 = vpack.c.b16 %v799, %v798
  %v985 = vpack.c.b16 %v801, %v800
  %v986 = vpack.c.b16 %v803, %v802
  %v987 = vpack.c.b16 %v805, %v804
  %v988 = vpack.c.b16 %v807, %v806
  %v989 = vpack.c.b16 %v809, %v808
  %v990 = vpack.c.b16 %v811, %v810
  %v991 = vpack.c.b16 %v813, %v812
  %v992 = vpack.c.b16 %v815, %v814
  %v993 = vpack.c.b16 %v817, %v816
  %v994 = vpack.c.b16 %v819, %v818
  %v995 = vpack.c.b16 %v821, %v820
  %v996 = vpack.c.b16 %v823, %v822
  %v997 = vpack.c.b16 %v825, %v824
  %v998 = vpack.c.b16 %v827, %v826
  %v999 = vpack.c.b16 %v829, %v828
  %v1000 = vpack.c.b16 %v831, %v830
  %v1001 = vpack.c.b16 %v833, %v832
  %v1002 = vpack.c.b16 %v835, %v834
  %v1003 = vpack.c.b16 %v837, %v836
  %v1004 = vpack.c.b16 %v839, %v838
  %v1005 = vpack.c.b16 %v841, %v840
  %v1006 = vpack.c.b16 %v843, %v842
  %v1007 = vpack.c.b16 %v845, %v844
  %v1008 = vpack.c.b16 %v847, %v846
  %v1009 = vpack.c.b16 %v849, %v848
  %v1010 = vpack.c.b16 %v851, %v850
  %v1011 = vpack.c.b16 %v853, %v852
  %v1012 = vpack.c.b16 %v855, %v854
  %v1013 = vpack.c.b16 %v857, %v856
  %v1014 = vpack.c.b16 %v859, %v858
  %v1015 = vpack.c.b16 %v861, %v860
  %v1016 = vpack.c.b16 %v863, %v862
  %v1017 = vpack.c.b16 %v865, %v864
  %v1018 = vpack.c.b16 %v867, %v866
  %v1019 = vpack.c.b16 %v869, %v868
  %v1020 = vpack.c.b16 %v871, %v870
  %v1021 = vpack.c.b16 %v873, %v872
  %v1022 = vpack.c.b16 %v875, %v874
  %v1023 = vpack.c.b16 %v877, %v876
  %v1024 = vpack.c.b16 %v879, %v878
  %v1025 = vpack.c.b16 %v881, %v880
  %v1026 = vpack.c.b16 %v883, %v882
  %v1027 = vpack.c.b16 %v885, %v884
  %v1028 = vpack.c.b16 %v887, %v886
  %v1029 = vpack.c.b16 %v889, %v888
  %v1030 = vpack.c.b16 %v891, %v890
  %v1031 = vpack.c.b16 %v893, %v892
  %v1032 = vpack.c.b16 %v895, %v894
  %v1033 = vpack.c.b16 %v897, %v896
  %v1034 = vpack.c.b16 %v899, %v898
  %v1035 = vpack.c.b16 %v901, %v900
  %v1036 = vpack.c.b16 %v903, %v902
  %v1037 = vpack.c.b16 %v905, %v904
  %v1038 = vpack.c.b16 %v907, %v906
  %v1039 = vpack.c.b16 %v909, %v908
  %v1040 = vpack.c.b16 %v911, %v910
  %v1041 = vpack.c.b16 %v913, %v912
  %v1042 = vpack.c.b16 %v915, %v914
  %v1043 = vpack.c.b16 %v917, %v916
  %v1044 = vpack.c.b16 %v919, %v918
  %v1045 = vpack.c.b16 %v921, %v920
  %v1046 = vpack.c.b16 %v923, %v922
  %v1047 = vpack.c.b16 %v925, %v924
  %v1048 = vpack.c.b16 %v927, %v926
  %v1049 = vpack.c.b16 %v929, %v928
  %1170 = vmatpush.bf16.msra.mxu0 %v937
  %1171 = vmatpush.bf16.msra.mxu0 %v936
  %1172 = vmatpush.bf16.msra.mxu0 %v935
  %1173 = vmatpush.bf16.msra.mxu0 %v934
  %1174 = vmatpush.bf16.msra.mxu0 %v933
  %1175 = vmatpush.bf16.msra.mxu0 %v932
  %1176 = vmatpush.bf16.msra.mxu0 %v931
  %1177 = vmatpush.bf16.msra.mxu0 %v930
  %1178 = vmatmul.bf16.gmra.mxu0 %v180
  %v1179 = vpop.f32.mrf.mxu0
  %v1180 = vadd.f32 0.0, %v1179
  %v1181 = vpop.f32.mrf.mxu0
  %v1182 = vadd.f32 0.0, %v1181
  %1183 = vmatmul.bf16.gmra.mxu0 %v195
  %v1184 = vpop.f32.mrf.mxu0
  %v1185 = vadd.f32 0.0, %v1184
  %v1186 = vpop.f32.mrf.mxu0
  %v1187 = vadd.f32 0.0, %v1186
  %1188 = vdwg.mxu0
  %1189 = vmatpush.bf16.msra.mxu0 %v945
  %1190 = vmatpush.bf16.msra.mxu0 %v944
  %1191 = vmatpush.bf16.msra.mxu0 %v943
  %1192 = vmatpush.bf16.msra.mxu0 %v942
  %1193 = vmatpush.bf16.msra.mxu0 %v941
  %1194 = vmatpush.bf16.msra.mxu0 %v940
  %1195 = vmatpush.bf16.msra.mxu0 %v939
  %1196 = vmatpush.bf16.msra.mxu0 %v938
  %1197 = vmatmul.bf16.gmra.mxu0 %v181
  %v1198 = vpop.f32.mrf.mxu0
  %v1199 = vadd.f32 %v1180, %v1198
  %v1200 = vpop.f32.mrf.mxu0
  %v1201 = vadd.f32 %v1182, %v1200
  %1202 = vmatmul.bf16.gmra.mxu0 %v196
  %v1203 = vpop.f32.mrf.mxu0
  %v1204 = vadd.f32 %v1185, %v1203
  %v1205 = vpop.f32.mrf.mxu0
  %v1206 = vadd.f32 %v1187, %v1205
  %1207 = vdwg.mxu0
  %1208 = vmatpush.bf16.msra.mxu0 %v953
  %1209 = vmatpush.bf16.msra.mxu0 %v952
  %1210 = vmatpush.bf16.msra.mxu0 %v951
  %1211 = vmatpush.bf16.msra.mxu0 %v950
  %1212 = vmatpush.bf16.msra.mxu0 %v949
  %1213 = vmatpush.bf16.msra.mxu0 %v948
  %1214 = vmatpush.bf16.msra.mxu0 %v947
  %1215 = vmatpush.bf16.msra.mxu0 %v946
  %1216 = vmatmul.bf16.gmra.mxu0 %v182
  %v1217 = vpop.f32.mrf.mxu0
  %v1218 = vadd.f32 %v1199, %v1217
  %v1219 = vpop.f32.mrf.mxu0
  %v1220 = vadd.f32 %v1201, %v1219
  %1221 = vmatmul.bf16.gmra.mxu0 %v197
  %v1222 = vpop.f32.mrf.mxu0
  %v1223 = vadd.f32 %v1204, %v1222
  %v1224 = vpop.f32.mrf.mxu0
  %v1225 = vadd.f32 %v1206, %v1224
  %1226 = vdwg.mxu0
  %1227 = vmatpush.bf16.msra.mxu0 %v961
  %1228 = vmatpush.bf16.msra.mxu0 %v960
  %1229 = vmatpush.bf16.msra.mxu0 %v959
  %1230 = vmatpush.bf16.msra.mxu0 %v958
  %1231 = vmatpush.bf16.msra.mxu0 %v957
  %1232 = vmatpush.bf16.msra.mxu0 %v956
  %1233 = vmatpush.bf16.msra.mxu0 %v955
  %1234 = vmatpush.bf16.msra.mxu0 %v954
  %1235 = vmatmul.bf16.gmra.mxu0 %v183
  %v1236 = vpop.f32.mrf.mxu0
  %v1237 = vadd.f32 %v1218, %v1236
  %v1238 = vpop.f32.mrf.mxu0
  %v1239 = vadd.f32 %v1220, %v1238
  %1240 = vmatmul.bf16.gmra.mxu0 %v198
  %v1241 = vpop.f32.mrf.mxu0
  %v1242 = vadd.f32 %v1223, %v1241
  %v1243 = vpop.f32.mrf.mxu0
  %v1244 = vadd.f32 %v1225, %v1243
  %1245 = vdwg.mxu0
  %1246 = vmatpush.bf16.msra.mxu0 %v969
  %1247 = vmatpush.bf16.msra.mxu0 %v968
  %1248 = vmatpush.bf16.msra.mxu0 %v967
  %1249 = vmatpush.bf16.msra.mxu0 %v966
  %1250 = vmatpush.bf16.msra.mxu0 %v965
  %1251 = vmatpush.bf16.msra.mxu0 %v964
  %1252 = vmatpush.bf16.msra.mxu0 %v963
  %1253 = vmatpush.bf16.msra.mxu0 %v962
  %1254 = vmatmul.bf16.gmra.mxu0 %v184
  %v1255 = vpop.f32.mrf.mxu0
  %v1256 = vadd.f32 %v1237, %v1255
  %v1257 = vpop.f32.mrf.mxu0
  %v1258 = vadd.f32 %v1239, %v1257
  %1259 = vmatmul.bf16.gmra.mxu0 %v199
  %v1260 = vpop.f32.mrf.mxu0
  %v1261 = vadd.f32 %v1242, %v1260
  %v1262 = vpop.f32.mrf.mxu0
  %v1263 = vadd.f32 %v1244, %v1262
  %1264 = vdwg.mxu0
  %1265 = vmatpush.bf16.msra.mxu0 %v977
  %1266 = vmatpush.bf16.msra.mxu0 %v976
  %1267 = vmatpush.bf16.msra.mxu0 %v975
  %1268 = vmatpush.bf16.msra.mxu0 %v974
  %1269 = vmatpush.bf16.msra.mxu0 %v973
  %1270 = vmatpush.bf16.msra.mxu0 %v972
  %1271 = vmatpush.bf16.msra.mxu0 %v971
  %1272 = vmatpush.bf16.msra.mxu0 %v970
  %1273 = vmatmul.bf16.gmra.mxu0 %v185
  %v1274 = vpop.f32.mrf.mxu0
  %v1275 = vadd.f32 %v1256, %v1274
  %v1276 = vpop.f32.mrf.mxu0
  %v1277 = vadd.f32 %v1258, %v1276
  %1278 = vmatmul.bf16.gmra.mxu0 %v200
  %v1279 = vpop.f32.mrf.mxu0
  %v1280 = vadd.f32 %v1261, %v1279
  %v1281 = vpop.f32.mrf.mxu0
  %v1282 = vadd.f32 %v1263, %v1281
  %1283 = vdwg.mxu0
  %1284 = vmatpush.bf16.msra.mxu0 %v985
  %1285 = vmatpush.bf16.msra.mxu0 %v984
  %1286 = vmatpush.bf16.msra.mxu0 %v983
  %1287 = vmatpush.bf16.msra.mxu0 %v982
  %1288 = vmatpush.bf16.msra.mxu0 %v981
  %1289 = vmatpush.bf16.msra.mxu0 %v980
  %1290 = vmatpush.bf16.msra.mxu0 %v979
  %1291 = vmatpush.bf16.msra.mxu0 %v978
  %1292 = vmatmul.bf16.gmra.mxu0 %v186
  %v1293 = vpop.f32.mrf.mxu0
  %v1294 = vadd.f32 %v1275, %v1293
  %v1295 = vpop.f32.mrf.mxu0
  %v1296 = vadd.f32 %v1277, %v1295
  %1297 = vmatmul.bf16.gmra.mxu0 %v201
  %v1298 = vpop.f32.mrf.mxu0
  %v1299 = vadd.f32 %v1280, %v1298
  %v1300 = vpop.f32.mrf.mxu0
  %v1301 = vadd.f32 %v1282, %v1300
  %1302 = vdwg.mxu0
  %1303 = vmatpush.bf16.msra.mxu0 %v993
  %1304 = vmatpush.bf16.msra.mxu0 %v992
  %1305 = vmatpush.bf16.msra.mxu0 %v991
  %1306 = vmatpush.bf16.msra.mxu0 %v990
  %1307 = vmatpush.bf16.msra.mxu0 %v989
  %1308 = vmatpush.bf16.msra.mxu0 %v988
  %1309 = vmatpush.bf16.msra.mxu0 %v987
  %1310 = vmatpush.bf16.msra.mxu0 %v986
  %1311 = vmatmul.bf16.gmra.mxu0 %v187
  %v1312 = vpop.f32.mrf.mxu0
  %v1313 = vadd.f32 %v1294, %v1312
  %v1314 = vpop.f32.mrf.mxu0
  %v1315 = vadd.f32 %v1296, %v1314
  %1316 = vmatmul.bf16.gmra.mxu0 %v202
  %v1317 = vpop.f32.mrf.mxu0
  %v1318 = vadd.f32 %v1299, %v1317
  %v1319 = vpop.f32.mrf.mxu0
  %v1320 = vadd.f32 %v1301, %v1319
  %1321 = vdwg.mxu0
  %1322 = vmatpush.bf16.msra.mxu0 %v1001
  %1323 = vmatpush.bf16.msra.mxu0 %v1000
  %1324 = vmatpush.bf16.msra.mxu0 %v999
  %1325 = vmatpush.bf16.msra.mxu0 %v998
  %1326 = vmatpush.bf16.msra.mxu0 %v997
  %1327 = vmatpush.bf16.msra.mxu0 %v996
  %1328 = vmatpush.bf16.msra.mxu0 %v995
  %1329 = vmatpush.bf16.msra.mxu0 %v994
  %1330 = vmatmul.bf16.gmra.mxu0 %v188
  %v1331 = vpop.f32.mrf.mxu0
  %v1332 = vadd.f32 %v1313, %v1331
  %v1333 = vpop.f32.mrf.mxu0
  %v1334 = vadd.f32 %v1315, %v1333
  %1335 = vmatmul.bf16.gmra.mxu0 %v203
  %v1336 = vpop.f32.mrf.mxu0
  %v1337 = vadd.f32 %v1318, %v1336
  %v1338 = vpop.f32.mrf.mxu0
  %v1339 = vadd.f32 %v1320, %v1338
  %1340 = vdwg.mxu0
  %1341 = vmatpush.bf16.msra.mxu0 %v1009
  %1342 = vmatpush.bf16.msra.mxu0 %v1008
  %1343 = vmatpush.bf16.msra.mxu0 %v1007
  %1344 = vmatpush.bf16.msra.mxu0 %v1006
  %1345 = vmatpush.bf16.msra.mxu0 %v1005
  %1346 = vmatpush.bf16.msra.mxu0 %v1004
  %1347 = vmatpush.bf16.msra.mxu0 %v1003
  %1348 = vmatpush.bf16.msra.mxu0 %v1002
  %1349 = vmatmul.bf16.gmra.mxu0 %v189
  %v1350 = vpop.f32.mrf.mxu0
  %v1351 = vadd.f32 %v1332, %v1350
  %v1352 = vpop.f32.mrf.mxu0
  %v1353 = vadd.f32 %v1334, %v1352
  %1354 = vmatmul.bf16.gmra.mxu0 %v204
  %v1355 = vpop.f32.mrf.mxu0
  %v1356 = vadd.f32 %v1337, %v1355
  %v1357 = vpop.f32.mrf.mxu0
  %v1358 = vadd.f32 %v1339, %v1357
  %1359 = vdwg.mxu0
  %1360 = vmatpush.bf16.msra.mxu0 %v1017
  %1361 = vmatpush.bf16.msra.mxu0 %v1016
  %1362 = vmatpush.bf16.msra.mxu0 %v1015
  %1363 = vmatpush.bf16.msra.mxu0 %v1014
  %1364 = vmatpush.bf16.msra.mxu0 %v1013
  %1365 = vmatpush.bf16.msra.mxu0 %v1012
  %1366 = vmatpush.bf16.msra.mxu0 %v1011
  %1367 = vmatpush.bf16.msra.mxu0 %v1010
  %1368 = vmatmul.bf16.gmra.mxu0 %v190
  %v1369 = vpop.f32.mrf.mxu0
  %v1370 = vadd.f32 %v1351, %v1369
  %v1371 = vpop.f32.mrf.mxu0
  %v1372 = vadd.f32 %v1353, %v1371
  %1373 = vmatmul.bf16.gmra.mxu0 %v205
  %v1374 = vpop.f32.mrf.mxu0
  %v1375 = vadd.f32 %v1356, %v1374
  %v1376 = vpop.f32.mrf.mxu0
  %v1377 = vadd.f32 %v1358, %v1376
  %1378 = vdwg.mxu0
  %1379 = vmatpush.bf16.msra.mxu0 %v1025
  %1380 = vmatpush.bf16.msra.mxu0 %v1024
  %1381 = vmatpush.bf16.msra.mxu0 %v1023
  %1382 = vmatpush.bf16.msra.mxu0 %v1022
  %1383 = vmatpush.bf16.msra.mxu0 %v1021
  %1384 = vmatpush.bf16.msra.mxu0 %v1020
  %1385 = vmatpush.bf16.msra.mxu0 %v1019
  %1386 = vmatpush.bf16.msra.mxu0 %v1018
  %1387 = vmatmul.bf16.gmra.mxu0 %v191
  %v1388 = vpop.f32.mrf.mxu0
  %v1389 = vadd.f32 %v1370, %v1388
  %v1390 = vpop.f32.mrf.mxu0
  %v1391 = vadd.f32 %v1372, %v1390
  %1392 = vmatmul.bf16.gmra.mxu0 %v206
  %v1393 = vpop.f32.mrf.mxu0
  %v1394 = vadd.f32 %v1375, %v1393
  %v1395 = vpop.f32.mrf.mxu0
  %v1396 = vadd.f32 %v1377, %v1395
  %1397 = vdwg.mxu0
  %1398 = vmatpush.bf16.msra.mxu0 %v1033
  %1399 = vmatpush.bf16.msra.mxu0 %v1032
  %1400 = vmatpush.bf16.msra.mxu0 %v1031
  %1401 = vmatpush.bf16.msra.mxu0 %v1030
  %1402 = vmatpush.bf16.msra.mxu0 %v1029
  %1403 = vmatpush.bf16.msra.mxu0 %v1028
  %1404 = vmatpush.bf16.msra.mxu0 %v1027
  %1405 = vmatpush.bf16.msra.mxu0 %v1026
  %1406 = vmatmul.bf16.gmra.mxu0 %v192
  %v1407 = vpop.f32.mrf.mxu0
  %v1408 = vadd.f32 %v1389, %v1407
  %v1409 = vpop.f32.mrf.mxu0
  %v1410 = vadd.f32 %v1391, %v1409
  %1411 = vmatmul.bf16.gmra.mxu0 %v207
  %v1412 = vpop.f32.mrf.mxu0
  %v1413 = vadd.f32 %v1394, %v1412
  %v1414 = vpop.f32.mrf.mxu0
  %v1415 = vadd.f32 %v1396, %v1414
  %1416 = vdwg.mxu0
  %1417 = vmatpush.bf16.msra.mxu0 %v1041
  %1418 = vmatpush.bf16.msra.mxu0 %v1040
  %1419 = vmatpush.bf16.msra.mxu0 %v1039
  %1420 = vmatpush.bf16.msra.mxu0 %v1038
  %1421 = vmatpush.bf16.msra.mxu0 %v1037
  %1422 = vmatpush.bf16.msra.mxu0 %v1036
  %1423 = vmatpush.bf16.msra.mxu0 %v1035
  %1424 = vmatpush.bf16.msra.mxu0 %v1034
  %1425 = vmatmul.bf16.gmra.mxu0 %v193
  %v1426 = vpop.f32.mrf.mxu0
  %v1427 = vadd.f32 %v1408, %v1426
  %v1428 = vpop.f32.mrf.mxu0
  %v1429 = vadd.f32 %v1410, %v1428
  %1430 = vmatmul.bf16.gmra.mxu0 %v208
  %v1431 = vpop.f32.mrf.mxu0
  %v1432 = vadd.f32 %v1413, %v1431
  %v1433 = vpop.f32.mrf.mxu0
  %v1434 = vadd.f32 %v1415, %v1433
  %1435 = vdwg.mxu0
  %1436 = vmatpush.bf16.msra.mxu0 %v1049
  %1437 = vmatpush.bf16.msra.mxu0 %v1048
  %1438 = vmatpush.bf16.msra.mxu0 %v1047
  %1439 = vmatpush.bf16.msra.mxu0 %v1046
  %1440 = vmatpush.bf16.msra.mxu0 %v1045
  %1441 = vmatpush.bf16.msra.mxu0 %v1044
  %1442 = vmatpush.bf16.msra.mxu0 %v1043
  %1443 = vmatpush.bf16.msra.mxu0 %v1042
  %1444 = vmatmul.bf16.gmra.mxu0 %v194
  %v1445 = vpop.f32.mrf.mxu0
  %v1446 = vadd.f32 %v1427, %v1445
  %v1447 = vpop.f32.mrf.mxu0
  %v1448 = vadd.f32 %v1429, %v1447
  %1449 = vmatmul.bf16.gmra.mxu0 %v209
  %v1450 = vpop.f32.mrf.mxu0
  %v1451 = vadd.f32 %v1432, %v1450
  %v1452 = vpop.f32.mrf.mxu0
  %v1453 = vadd.f32 %v1434, %v1452
  %1454 = vdwg.mxu0
  %v1455 = vld [vmem:[#allocation2] sm:$0x3]
  %v1456 = vadd.f32 %v1446, %v1448
  %v1457 = vrot.slane %v1456, 4
  %v1458 = vadd.f32 %v1456, %v1457
  %v1459 = vrot.slane %v1458, 2
  %v1460 = vadd.f32 %v1458, %v1459
  %v1461 = vrot.slane %v1460, 1
  %v1462 = vadd.f32 %v1460, %v1461
  %v1463 = vadd.f32 %v1451, %v1453
  %v1464 = vrot.slane %v1463, 4
  %v1465 = vadd.f32 %v1463, %v1464
  %v1466 = vrot.slane %v1465, 2
  %v1467 = vadd.f32 %v1465, %v1466
  %v1468 = vrot.slane %v1467, 1
  %v1469 = vadd.f32 %v1467, %v1468
  %vm1472 = vcmask 1041409
  %v1473 = vsel %vm1472, %v1469, %v1462
  %v1475 = vadd.f32 %v1455, %v1473
  %1476 = vst [vmem:[#allocation2] sm:$0x3] %v1475
  // Predicated region
  $region30: #{single_branch_cnn_forward.1} parent=0 // pred_check
    %p1477 = pneg %p23
  $region31: #{single_branch_cnn_forward.1} parent=0 // pred_check_branch
    %1479 = sbr.rel (%p1477) target = $region33
  $region32: #{single_branch_cnn_forward.1} parent=0 // pred_region
    %v1480 = vld [vmem:[#allocation2] sm:$0x3]
    %v1481 = vmul.f32 %v1480, 0.0625
    %v1482 = vld [vmem:[%s2] sm:$0x1]
    %v1484 = vperm.slane %v1482, 0
    %v1486 = vadd.f32 %v1481, %v1484
    %vm1487 = vcmp.gt.f32.partialorder %v1486, 0.0
    %v1488 = vmul.f32 %v1486, 0.01
    %v1489 = vsel %vm1487, %v1486, %v1488
    %v1490 = vpack.c.bf16 %v1489, %v1489
    %v1491 = vld [vmem:[%s3] sm:$0xf]
    %v1492 = vld [vmem:[%s3 + $0x4] sm:$0xf]
    %v1493 = vld [vmem:[%s3 + $0x8] sm:$0xf]
    %v1494 = vld [vmem:[%s3 + $0xc] sm:$0xf]
    %v1495 = vld [vmem:[%s3 + $0x10] sm:$0xf]
    %v1496 = vld [vmem:[%s3 + $0x14] sm:$0xf]
    %v1497 = vld [vmem:[%s3 + $0x18] sm:$0xf]
    %v1498 = vld [vmem:[%s3 + $0x1c] sm:$0xf]
    %v1499 = vld [vmem:[%s3 + $0x20] sm:$0xf]
    %v1500 = vld [vmem:[%s3 + $0x24] sm:$0xf]
    %v1501 = vld [vmem:[%s3 + $0x28] sm:$0xf]
    %v1502 = vld [vmem:[%s3 + $0x2c] sm:$0xf]
    %v1503 = vld [vmem:[%s3 + $0x30] sm:$0xf]
    %v1504 = vld [vmem:[%s3 + $0x34] sm:$0xf]
    %v1505 = vld [vmem:[%s3 + $0x38] sm:$0xf]
    %v1506 = vld [vmem:[%s3 + $0x3c] sm:$0xf]
    %v1507 = vpack.c.bf16 %v1486, %v1486
    %v1508 = vld [vmem:[%s4] sm:$0xf]
    %v1509 = vld [vmem:[%s4 + $0x4] sm:$0xf]
    %v1510 = vld [vmem:[%s4 + $0x8] sm:$0xf]
    %v1511 = vld [vmem:[%s4 + $0xc] sm:$0xf]
    %v1512 = vld [vmem:[%s4 + $0x10] sm:$0xf]
    %v1513 = vld [vmem:[%s4 + $0x14] sm:$0xf]
    %v1514 = vld [vmem:[%s4 + $0x18] sm:$0xf]
    %v1515 = vld [vmem:[%s4 + $0x1c] sm:$0xf]
    %v1516 = vld [vmem:[%s4 + $0x20] sm:$0xf]
    %v1517 = vld [vmem:[%s4 + $0x24] sm:$0xf]
    %v1518 = vld [vmem:[%s4 + $0x28] sm:$0xf]
    %v1519 = vld [vmem:[%s4 + $0x2c] sm:$0xf]
    %v1520 = vld [vmem:[%s4 + $0x30] sm:$0xf]
    %v1521 = vld [vmem:[%s4 + $0x34] sm:$0xf]
    %v1522 = vld [vmem:[%s4 + $0x38] sm:$0xf]
    %v1523 = vld [vmem:[%s4 + $0x3c] sm:$0xf]
    %v1540 = vunpack.c.l.b16 %v1508
    %v1541 = vunpack.c.l.b16 %v1509
    %v1542 = vunpack.c.l.b16 %v1510
    %v1543 = vunpack.c.l.b16 %v1511
    %v1544 = vunpack.c.l.b16 %v1512
    %v1545 = vunpack.c.l.b16 %v1513
    %v1546 = vunpack.c.l.b16 %v1514
    %v1547 = vunpack.c.l.b16 %v1515
    %v1548 = vunpack.c.l.b16 %v1516
    %v1549 = vunpack.c.l.b16 %v1517
    %v1550 = vunpack.c.l.b16 %v1518
    %v1551 = vunpack.c.l.b16 %v1519
    %v1552 = vunpack.c.l.b16 %v1520
    %v1553 = vunpack.c.l.b16 %v1521
    %v1554 = vunpack.c.l.b16 %v1522
    %v1555 = vunpack.c.l.b16 %v1523
    %v1556 = vpack.c.b16 %v1541, %v1540
    %v1557 = vpack.c.b16 %v1543, %v1542
    %v1558 = vpack.c.b16 %v1545, %v1544
    %v1559 = vpack.c.b16 %v1547, %v1546
    %v1560 = vpack.c.b16 %v1549, %v1548
    %v1561 = vpack.c.b16 %v1551, %v1550
    %v1562 = vpack.c.b16 %v1553, %v1552
    %v1563 = vpack.c.b16 %v1555, %v1554
    %1572 = vmatpush.bf16.msra.mxu0 %v1563
    %1573 = vmatpush.bf16.msra.mxu0 %v1562
    %1574 = vmatpush.bf16.msra.mxu0 %v1561
    %1575 = vmatpush.bf16.msra.mxu0 %v1560
    %1576 = vmatpush.bf16.msra.mxu0 %v1559
    %1577 = vmatpush.bf16.msra.mxu0 %v1558
    %1578 = vmatpush.bf16.msra.mxu0 %v1557
    %1579 = vmatpush.bf16.msra.mxu0 %v1556
    %1580 = vmatmul.bf16.gmra.mxu0 %v1507
    %v1581 = vpop.f32.mrf.mxu0
    %v1582 = vadd.f32 0.0, %v1581
    %v1583 = vpop.f32.mrf.mxu0
    %1584 = vdwg.mxu0
    %v1601 = vunpack.c.l.b16 %v1491
    %v1602 = vunpack.c.l.b16 %v1492
    %v1603 = vunpack.c.l.b16 %v1493
    %v1604 = vunpack.c.l.b16 %v1494
    %v1605 = vunpack.c.l.b16 %v1495
    %v1606 = vunpack.c.l.b16 %v1496
    %v1607 = vunpack.c.l.b16 %v1497
    %v1608 = vunpack.c.l.b16 %v1498
    %v1609 = vunpack.c.l.b16 %v1499
    %v1610 = vunpack.c.l.b16 %v1500
    %v1611 = vunpack.c.l.b16 %v1501
    %v1612 = vunpack.c.l.b16 %v1502
    %v1613 = vunpack.c.l.b16 %v1503
    %v1614 = vunpack.c.l.b16 %v1504
    %v1615 = vunpack.c.l.b16 %v1505
    %v1616 = vunpack.c.l.b16 %v1506
    %v1617 = vpack.c.b16 %v1602, %v1601
    %v1618 = vpack.c.b16 %v1604, %v1603
    %v1619 = vpack.c.b16 %v1606, %v1605
    %v1620 = vpack.c.b16 %v1608, %v1607
    %v1621 = vpack.c.b16 %v1610, %v1609
    %v1622 = vpack.c.b16 %v1612, %v1611
    %v1623 = vpack.c.b16 %v1614, %v1613
    %v1624 = vpack.c.b16 %v1616, %v1615
    %1633 = vmatpush.bf16.msra.mxu0 %v1624
    %1634 = vmatpush.bf16.msra.mxu0 %v1623
    %1635 = vmatpush.bf16.msra.mxu0 %v1622
    %1636 = vmatpush.bf16.msra.mxu0 %v1621
    %1637 = vmatpush.bf16.msra.mxu0 %v1620
    %1638 = vmatpush.bf16.msra.mxu0 %v1619
    %1639 = vmatpush.bf16.msra.mxu0 %v1618
    %1640 = vmatpush.bf16.msra.mxu0 %v1617
    %1641 = vmatmul.bf16.gmra.mxu0 %v1490
    %v1642 = vpop.f32.mrf.mxu0
    %v1643 = vadd.f32 %v1582, %v1642
    %v1644 = vpop.f32.mrf.mxu0
    %1645 = vdwg.mxu0
    %v1646 = vld [vmem:[%s5] sm:$0x1]
    %v1648 = vperm.slane %v1646, 0
    %v1650 = vadd.f32 %v1643, %v1648
    %1651 = vst [vmem:[%s6] sm:$0x3] %v1650
  $region33: #{single_branch_cnn_forward.1} parent=0 // pred_fallthru
    _
  // Predicated region
  $region34: #{single_branch_cnn_forward.1} parent=0 // pred_check
    _
  $region35: #{single_branch_cnn_forward.1} parent=0 // pred_check_branch
    %1653 = sbr.rel (0) target = $region37
  $region36: #{single_branch_cnn_forward.1} parent=0 // pred_region
    _
  $region37: #{single_branch_cnn_forward.1} parent=0 // pred_fallthru
    _
  // Predicated region
  $region38: #{single_branch_cnn_forward.1} parent=0 // pred_check
    _
  $region39: #{single_branch_cnn_forward.1} parent=0 // pred_check_branch
    %1655 = sbr.rel (0) target = $region41
  $region40: #{single_branch_cnn_forward.1} parent=0 // pred_region
    _
  $region41: #{single_branch_cnn_forward.1} parent=0 // pred_fallthru
    _

</llo_original>
